<compile_context>
chip_gen: v6e
topology: v6e:2x2x1
jax: 0.10.0
libtpu: 0.0.40
codegen_flags: <defaults>
</compile_context>

<pallas_src>
import functools

import jax
import jax.numpy as jnp
from jax import lax
from jax.experimental import pallas as pl
from jax.experimental.pallas import tpu as pltpu


def _vmem_limit_bytes():
    """Generation-aware scoped-VMEM limit: ~5/8 of physical, capped, with safe fallback."""
    cap = 64 * 1024 * 1024
    try:
        info_cap = int(pltpu.get_tpu_info().vmem_capacity_bytes)
        if info_cap > 0:
            cap = info_cap
    except Exception:
        pass
    return int(max(32 * 1024 * 1024, min(cap * 5 // 8, 96 * 1024 * 1024)))


def _pick_tile(m, other_steps, per_col_bytes, vmem_budget=12 * 1024 * 1024):
    """Lane tile over the 128-aligned dim m: largest 128-multiple divisor of m within a
    per-step VMEM byte budget. If the whole grid would collapse to one step (idling one
    v7x TensorCore), shrink the tile to get >=2 steps when possible."""
    assert m % 128 == 0
    target = max(128, min(2048, (vmem_budget // max(per_col_bytes, 1)) // 128 * 128))
    best = m
    if m > target:
        best = 128
        for t in range(256, target + 1, 128):
            if m % t == 0:
                best = t
    if other_steps * (m // best) < 2:
        cands = [t for t in range(128, best, 128) if m % t == 0]
        if cands:
            best = max(cands)
    return best


# ---------------------------------------------------------------------------
# Kernel 1: fused Spa2Ang -> AngConv (+ReLU + residual) and Ang2Spa 1x1 conv.
# All dots bf16 x bf16 -> f32; residual path stays f32.
# ---------------------------------------------------------------------------
def _ang_kernel(xs2d_ref, xa_ref, ws2a_ref, wa1_ref, wa2_ref, wa2s_ref,
                oa_ref, y_ref):
    x_s2d = xs2d_ref[...]                       # (r*r*C, bm)  bf16 phase-major s2d of xs
    xa_f32 = xa_ref[...]                        # (C, bm)      f32 (exact residual)
    xa_bf = xa_f32.astype(jnp.bfloat16)
    # Spa2Ang (k=r, stride=r conv) == one matmul over (a, b, c_in), + ReLU
    ang2 = jnp.maximum(
        jnp.dot(ws2a_ref[...], x_s2d, preferred_element_type=jnp.float32), 0.0)
    # Ang2Spa 1x1 conv; output channels already phase-major (a, b, c) so PixelShuffle is
    # a free reshape on the consumer side.  Stored bf16 (feeds bf16 dots in kernel 2).
    y_ref[...] = jnp.dot(wa2s_ref[...], xa_bf,
                         preferred_element_type=jnp.float32).astype(y_ref.dtype)
    # AngConv on cat(xa, ang2) as two accumulating dots (no concat), ReLU, + xa.
    out = (jnp.dot(wa1_ref[...], xa_bf, preferred_element_type=jnp.float32)
           + jnp.dot(wa2_ref[...], ang2.astype(jnp.bfloat16),
                     preferred_element_type=jnp.float32))
    oa_ref[...] = (jnp.maximum(out, 0.0) + xa_f32).astype(oa_ref.dtype)


# ---------------------------------------------------------------------------
# Kernel 2: SpaConv (3x3, dilation=r, pad=r) in the phase-major domain:
#           9 taps, each one K=2C accumulating dot on the channel-stacked input.
# ---------------------------------------------------------------------------
def _spa_kernel(xy_ref, w_ref, os_ref, *, wp, l_out):
    c_out = os_ref.shape[0]
    acc = jnp.zeros((c_out, l_out), jnp.float32)
    for t in range(9):                          # static unroll: 9 MXU dots, K = 2C
        off = (t // 3) * wp + (t % 3)           # tap offset in flattened padded grid
        acc = acc + jnp.dot(w_ref[t], xy_ref[:, pl.ds(off, l_out)],
                            preferred_element_type=jnp.float32)
    os_ref[...] = jnp.maximum(acc, 0.0).astype(os_ref.dtype)   # residual added in wrapper


# ---------------------------------------------------------------------------
# InterBlock forward (Pallas-backed)
# ---------------------------------------------------------------------------
def inter_block_forward(xa, xs, params, ang_res):
    r = int(ang_res)
    N, C, h, w = xa.shape
    _, _, H, W = xs.shape
    assert H == h * r and W == w * r, "xs must be (N, C, h*angRes, w*angRes)"

    cdt = jnp.bfloat16
    RRC = r * r * C
    hw = h * w
    hw_pad = ((hw + 127) // 128) * 128          # lane-dense kernel-1 stores
    # spa-domain padded width: lane-align if cheap (<=25% extra cols), else compact.
    wp_aligned = ((w + 2 + 127) // 128) * 128
    wp = wp_aligned if wp_aligned <= (w + 2) * 5 // 4 else w + 2
    hp = h + 3                                  # 1 top / 2 bottom rows: tail slack for taps
    Lp = hp * wp                                # flattened padded length per phase
    Lout = h * wp                               # flattened output length (cols >= w garbage)
    assert Lout == h * wp and 2 * wp + 2 + Lout <= Lp   # tap slices stay in-bounds

    # ---- weights, rearranged once (tiny) to phase-major (a, b, c) ordering, bf16 -------
    w_s2a = params["Spa2Ang"]     # (C, C, r, r)        [co, ci, a, b]
    w_a2s = params["Ang2Spa"]     # (r*r*C, C, 1, 1)    [(c*r+a)*r+b, ci]
    w_ang = params["AngConv"]     # (C, 2C, 1, 1)
    w_spa = params["SpaConv"]     # (C, 2C, 3, 3)

    w_s2a_m = jnp.transpose(w_s2a, (0, 2, 3, 1)).reshape(C, RRC).astype(cdt)
    w_a2s_m = jnp.transpose(w_a2s.reshape(C, r, r, C),
                            (1, 2, 0, 3)).reshape(RRC, C).astype(cdt)
    w_ang_m = w_ang.reshape(C, 2 * C).astype(cdt)
    w_ang1, w_ang2 = w_ang_m[:, :C], w_ang_m[:, C:]
    w_spa_m = jnp.transpose(w_spa, (2, 3, 0, 1)).reshape(9, C, 2 * C).astype(cdt)

    # ---- phase-major space-to-depth of xs (single XLA relayout), bf16 -------------------
    # xs_s2d[n, a, b, c, i, j] = xs[n, c, i*r + a, j*r + b]
    xs_s2d = jnp.transpose(xs.reshape(N, C, h, r, w, r), (0, 3, 5, 1, 2, 4)).astype(cdt)
    xs_s2d_flat = jnp.pad(xs_s2d.reshape(N, RRC, hw),
                          ((0, 0), (0, 0), (0, hw_pad - hw)))
    xa_flat = jnp.pad(xa.reshape(N, C, hw), ((0, 0), (0, 0), (0, hw_pad - hw)))

    vmem_limit = _vmem_limit_bytes()

    # ================= Pallas call 1: angular branch + Ang2Spa ==========================
    per_col_bytes = 4 * RRC + 8 * C             # bf16 in/out (RRC) + f32 in/out (C)
    bm = _pick_tile(hw_pad, N, per_col_bytes)
    grid_a = (N, hw_pad // bm)
    flops_a = int(2 * N * hw_pad * (2 * C * RRC + 2 * C * C))
    bytes_a = int(N * hw_pad * (2 * RRC + 4 * C + 4 * C + 2 * RRC)
                  + 2 * (2 * C * RRC + 2 * C * C))
    out_a_flat, y = pl.pallas_call(
        _ang_kernel,
        grid=grid_a,
        in_specs=[
            pl.BlockSpec((None, RRC, bm), lambda n, m: (n, 0, m)),
            pl.BlockSpec((None, C, bm), lambda n, m: (n, 0, m)),
            pl.BlockSpec((C, RRC), lambda n, m: (0, 0)),
            pl.BlockSpec((C, C), lambda n, m: (0, 0)),
            pl.BlockSpec((C, C), lambda n, m: (0, 0)),
            pl.BlockSpec((RRC, C), lambda n, m: (0, 0)),
        ],
        out_specs=(
            pl.BlockSpec((None, C, bm), lambda n, m: (n, 0, m)),
            pl.BlockSpec((None, RRC, bm), lambda n, m: (n, 0, m)),
        ),
        out_shape=(
            jax.ShapeDtypeStruct((N, C, hw_pad), xa.dtype),
            jax.ShapeDtypeStruct((N, RRC, hw_pad), cdt),
        ),
        compiler_params=pltpu.CompilerParams(
            dimension_semantics=("parallel", "parallel"),
            vmem_limit_bytes=vmem_limit,
        ),
        cost_estimate=pl.CostEstimate(
            flops=flops_a, transcendentals=0, bytes_accessed=bytes_a),
    )(xs_s2d_flat, xa_flat, w_s2a_m, w_ang1, w_ang2, w_a2s_m)

    out_a = out_a_flat[:, :, :hw].reshape(N, C, h, w)

    # ================= Pallas call 2: spatial branch (SpaConv) ==========================
    # y is already phase-major; stack [xs ; y] on channels (matches SpaConv in-channel
    # order) and zero-pad the (h, w) grid once -> single bf16 input, K = 2C dots.
    y6 = y[:, :, :hw].reshape(N, r, r, C, h, w)
    xy6 = jnp.concatenate([xs_s2d, y6], axis=3)                      # (N, r, r, 2C, h, w)
    xy_pad = jnp.pad(xy6, ((0, 0), (0, 0), (0, 0), (0, 0), (1, 2), (1, wp - w - 1)))
    xy_pad = xy_pad.reshape(N, r * r, 2 * C, Lp)

    flops_s = int(N * r * r * Lout * 36 * C * C)
    bytes_s = int(N * r * r * (2 * C * Lp * 2 + C * Lout * 4) + 9 * C * 2 * C * 2)
    out_s_flat = pl.pallas_call(
        functools.partial(_spa_kernel, wp=wp, l_out=Lout),
        grid=(N, r * r),
        in_specs=[
            pl.BlockSpec((None, None, 2 * C, Lp), lambda n, p: (n, p, 0, 0)),
            pl.BlockSpec((9, C, 2 * C), lambda n, p: (0, 0, 0)),
        ],
        out_specs=pl.BlockSpec((None, None, C, Lout), lambda n, p: (n, p, 0, 0)),
        out_shape=jax.ShapeDtypeStruct((N, r * r, C, Lout), xs.dtype),
        compiler_params=pltpu.CompilerParams(
            dimension_semantics=("parallel", "parallel"),
            vmem_limit_bytes=vmem_limit,
        ),
        cost_estimate=pl.CostEstimate(
            flops=flops_s, transcendentals=0, bytes_accessed=bytes_s),
    )(xy_pad, w_spa_m)

    # depth-to-space (inverse phase-major view), drop the garbage columns (>= w) per row,
    # and apply the f32 residual here (fuses into this relayout pass).
    out_s = out_s_flat.reshape(N, r, r, C, h, wp)[..., :w]
    out_s = jnp.transpose(out_s, (0, 3, 4, 1, 5, 2)).reshape(N, C, H, W) + xs

    return out_a, out_s


# ---------------------------------------------------------------------------
# Pure-JAX reference (mirrors the PyTorch module exactly) for verification
# ---------------------------------------------------------------------------
def reference_forward(xa, xs, params, r):
    dn = ("NCHW", "OIHW", "NCHW")
    prec = lax.Precision.HIGHEST
    N, C, h, w = xa.shape
    H, W = h * r, w * r
    buf_ang2 = jax.nn.relu(lax.conv_general_dilated(
        xs, params["Spa2Ang"], (r, r), "VALID", dimension_numbers=dn, precision=prec))
    y = lax.conv_general_dilated(
        xa, params["Ang2Spa"], (1, 1), "VALID", dimension_numbers=dn, precision=prec)
    y = y.reshape(N, C, r, r, h, w)
    buf_spa2 = jnp.transpose(y, (0, 1, 4, 2, 5, 3)).reshape(N, C, H, W)   # PixelShuffle(r)
    buf_a = jnp.concatenate([xa, buf_ang2], axis=1)
    buf_s = jnp.concatenate([xs, buf_spa2], axis=1)
    out_a = jax.nn.relu(lax.conv_general_dilated(
        buf_a, params["AngConv"], (1, 1), "VALID",
        dimension_numbers=dn, precision=prec)) + xa
    out_s = jax.nn.relu(lax.conv_general_dilated(
        buf_s, params["SpaConv"], (1, 1), ((r, r), (r, r)),
        rhs_dilation=(r, r), dimension_numbers=dn, precision=prec)) + xs
    return out_a, out_s


if __name__ == "__main__":
    ang_res = 2
    channels = 4
    N = 2
    h = w = 8
    H, W = h * ang_res, w * ang_res

    key = jax.random.PRNGKey(0)
    k = jax.random.split(key, 6)

    def rnd(key, shape, scale=1.0):
        # bf16-representable test values keep the kernel-vs-reference comparison tight
        # (the kernels run their MXU dots in bf16 with f32 accumulation).
        v = scale * jax.random.normal(key, shape, jnp.float32)
        return v.astype(jnp.bfloat16).astype(jnp.float32)

    xa = rnd(k[0], (N, channels, h, w))
    xs = rnd(k[1], (N, channels, H, W))
    params = {
        "Spa2Ang": rnd(k[2], (channels, channels, ang_res, ang_res), 0.1),
        "Ang2Spa": rnd(k[3], (ang_res * ang_res * channels, channels, 1, 1), 0.1),
        "AngConv": rnd(k[4], (channels, 2 * channels, 1, 1), 0.1),
        "SpaConv": rnd(k[5], (channels, 2 * channels, 3, 3), 0.1),
    }

    fwd = jax.jit(functools.partial(inter_block_forward, ang_res=ang_res))
    out_a, out_s = fwd(xa, xs, params)
    jax.block_until_ready((out_a, out_s))

    ref_a, ref_s = reference_forward(xa, xs, params, ang_res)
    assert out_a.shape == xa.shape and out_s.shape == xs.shape
    assert jnp.allclose(out_a, ref_a, atol=2e-3, rtol=2e-3), (
        "out_a mismatch: max err %e" % float(jnp.max(jnp.abs(out_a - ref_a))))
    assert jnp.allclose(out_s, ref_s, atol=2e-3, rtol=2e-3), (
        "out_s mismatch: max err %e" % float(jnp.max(jnp.abs(out_s - ref_s))))
    print("KERNEL_OK")
</pallas_src>

<mosaic_0001>
module attributes {stable_mosaic.version = 11 : i64} {
  func.func @_ang_kernel(%arg0: i32, %arg1: i32, %arg2: memref<1x16x128xbf16, #tpu.memory_space<vmem>>, %arg3: memref<1x4x128xf32, #tpu.memory_space<vmem>>, %arg4: memref<4x16xbf16, #tpu.memory_space<vmem>>, %arg5: memref<4x4xbf16, #tpu.memory_space<vmem>>, %arg6: memref<4x4xbf16, #tpu.memory_space<vmem>>, %arg7: memref<16x4xbf16, #tpu.memory_space<vmem>>, %arg8: memref<1x4x128xf32, #tpu.memory_space<vmem>>, %arg9: memref<1x16x128xbf16, #tpu.memory_space<vmem>>) attributes {dimension_semantics = [#tpu.dimension_semantics<parallel>, #tpu.dimension_semantics<parallel>], iteration_bounds = array<i64: 2, 1>, scalar_prefetch = 0 : i64, scratch_operands = 0 : i64, tpu.core_type = #tpu.core_type<tc>, window_params = [{transform_indices = @transform_0, window_bounds = array<i64: 1, 16, 128>}, {transform_indices = @transform_1, window_bounds = array<i64: 1, 4, 128>}, {pipeline_mode = #tpu.pipeline_mode<synchronous>, transform_indices = @transform_2, window_bounds = array<i64: 4, 16>}, {pipeline_mode = #tpu.pipeline_mode<synchronous>, transform_indices = @transform_3, window_bounds = array<i64: 4, 4>}, {pipeline_mode = #tpu.pipeline_mode<synchronous>, transform_indices = @transform_4, window_bounds = array<i64: 4, 4>}, {pipeline_mode = #tpu.pipeline_mode<synchronous>, transform_indices = @transform_5, window_bounds = array<i64: 16, 4>}, {transform_indices = @transform_6, window_bounds = array<i64: 1, 4, 128>}, {transform_indices = @transform_7, window_bounds = array<i64: 1, 16, 128>}]} {
    %c0 = arith.constant 0 : index
    %c0_0 = arith.constant 0 : index
    %c0_1 = arith.constant 0 : index
    %0 = vector.load %arg2[%c0, %c0_0, %c0_1] : memref<1x16x128xbf16, #tpu.memory_space<vmem>>, vector<1x16x128xbf16>
    %1 = vector.shape_cast %0 : vector<1x16x128xbf16> to vector<16x128xbf16>
    %c0_2 = arith.constant 0 : index
    %c0_3 = arith.constant 0 : index
    %c0_4 = arith.constant 0 : index
    %2 = vector.load %arg3[%c0_2, %c0_3, %c0_4] : memref<1x4x128xf32, #tpu.memory_space<vmem>>, vector<1x4x128xf32>
    %3 = vector.shape_cast %2 : vector<1x4x128xf32> to vector<4x128xf32>
    %4 = arith.truncf %3 : vector<4x128xf32> to vector<4x128xbf16>
    %c0_5 = arith.constant 0 : index
    %c0_6 = arith.constant 0 : index
    %5 = vector.load %arg4[%c0_5, %c0_6] : memref<4x16xbf16, #tpu.memory_space<vmem>>, vector<4x16xbf16>
    %cst = arith.constant dense<0.000000e+00> : vector<4x128xf32>
    %6 = tpu.matmul %5, %1, %cst {dimension_numbers = #tpu.dot_dimension_numbers<[1], [0], [0], [1], [0, 0, 1, 1], [], []>} : vector<4x16xbf16>, vector<16x128xbf16>, vector<4x128xf32> -> vector<4x128xf32>
    %cst_7 = arith.constant 0.000000e+00 : f32
    %7 = vector.broadcast %cst_7 : f32 to vector<4x128xf32>
    %8 = arith.maximumf %6, %7 : vector<4x128xf32>
    %c0_8 = arith.constant 0 : index
    %c0_9 = arith.constant 0 : index
    %9 = vector.load %arg7[%c0_8, %c0_9] : memref<16x4xbf16, #tpu.memory_space<vmem>>, vector<16x4xbf16>
    %cst_10 = arith.constant dense<0.000000e+00> : vector<16x128xf32>
    %10 = tpu.matmul %9, %4, %cst_10 {dimension_numbers = #tpu.dot_dimension_numbers<[1], [0], [0], [1], [0, 0, 1, 1], [], []>} : vector<16x4xbf16>, vector<4x128xbf16>, vector<16x128xf32> -> vector<16x128xf32>
    %11 = arith.truncf %10 : vector<16x128xf32> to vector<16x128xbf16>
    %c0_11 = arith.constant 0 : index
    %c0_12 = arith.constant 0 : index
    %c0_13 = arith.constant 0 : index
    %12 = vector.load %arg9[%c0_11, %c0_12, %c0_13] : memref<1x16x128xbf16, #tpu.memory_space<vmem>>, vector<1x16x128xbf16>
    %13 = vector.shape_cast %12 : vector<1x16x128xbf16> to vector<16x128xbf16>
    %14 = vector.shape_cast %11 : vector<16x128xbf16> to vector<1x16x128xbf16>
    tpu.vector_store %arg9[%c0_11, %c0_12, %c0_13], %14 {strides = array<i32>} : memref<1x16x128xbf16, #tpu.memory_space<vmem>>, vector<1x16x128xbf16>,
    %c0_14 = arith.constant 0 : index
    %c0_15 = arith.constant 0 : index
    %15 = vector.load %arg5[%c0_14, %c0_15] : memref<4x4xbf16, #tpu.memory_space<vmem>>, vector<4x4xbf16>
    %cst_16 = arith.constant dense<0.000000e+00> : vector<4x128xf32>
    %16 = tpu.matmul %15, %4, %cst_16 {dimension_numbers = #tpu.dot_dimension_numbers<[1], [0], [0], [1], [0, 0, 1, 1], [], []>} : vector<4x4xbf16>, vector<4x128xbf16>, vector<4x128xf32> -> vector<4x128xf32>
    %c0_17 = arith.constant 0 : index
    %c0_18 = arith.constant 0 : index
    %17 = vector.load %arg6[%c0_17, %c0_18] : memref<4x4xbf16, #tpu.memory_space<vmem>>, vector<4x4xbf16>
    %18 = arith.truncf %8 : vector<4x128xf32> to vector<4x128xbf16>
    %cst_19 = arith.constant dense<0.000000e+00> : vector<4x128xf32>
    %19 = tpu.matmul %17, %18, %cst_19 {dimension_numbers = #tpu.dot_dimension_numbers<[1], [0], [0], [1], [0, 0, 1, 1], [], []>} : vector<4x4xbf16>, vector<4x128xbf16>, vector<4x128xf32> -> vector<4x128xf32>
    %20 = arith.addf %16, %19 : vector<4x128xf32>
    %cst_20 = arith.constant 0.000000e+00 : f32
    %21 = vector.broadcast %cst_20 : f32 to vector<4x128xf32>
    %22 = arith.maximumf %20, %21 : vector<4x128xf32>
    %23 = arith.addf %22, %3 : vector<4x128xf32>
    %c0_21 = arith.constant 0 : index
    %c0_22 = arith.constant 0 : index
    %c0_23 = arith.constant 0 : index
    %24 = vector.load %arg8[%c0_21, %c0_22, %c0_23] : memref<1x4x128xf32, #tpu.memory_space<vmem>>, vector<1x4x128xf32>
    %25 = vector.shape_cast %24 : vector<1x4x128xf32> to vector<4x128xf32>
    %26 = vector.shape_cast %23 : vector<4x128xf32> to vector<1x4x128xf32>
    tpu.vector_store %arg8[%c0_21, %c0_22, %c0_23], %26 {strides = array<i32>} : memref<1x4x128xf32, #tpu.memory_space<vmem>>, vector<1x4x128xf32>,
    return
  }
  func.func @transform_0(%arg0: i32, %arg1: i32) -> (i32, i32, i32) {
    %c0_i32 = arith.constant 0 : i32
    %c0_i32_0 = arith.constant 0 : i32
    return %arg0, %c0_i32, %arg1 : i32, i32, i32
  }
  func.func @transform_1(%arg0: i32, %arg1: i32) -> (i32, i32, i32) {
    %c0_i32 = arith.constant 0 : i32
    %c0_i32_0 = arith.constant 0 : i32
    return %arg0, %c0_i32, %arg1 : i32, i32, i32
  }
  func.func @transform_2(%arg0: i32, %arg1: i32) -> (i32, i32) {
    %c0_i32 = arith.constant 0 : i32
    %c0_i32_0 = arith.constant 0 : i32
    %c0_i32_1 = arith.constant 0 : i32
    return %c0_i32, %c0_i32_0 : i32, i32
  }
  func.func @transform_3(%arg0: i32, %arg1: i32) -> (i32, i32) {
    %c0_i32 = arith.constant 0 : i32
    %c0_i32_0 = arith.constant 0 : i32
    %c0_i32_1 = arith.constant 0 : i32
    return %c0_i32, %c0_i32_0 : i32, i32
  }
  func.func @transform_4(%arg0: i32, %arg1: i32) -> (i32, i32) {
    %c0_i32 = arith.constant 0 : i32
    %c0_i32_0 = arith.constant 0 : i32
    %c0_i32_1 = arith.constant 0 : i32
    return %c0_i32, %c0_i32_0 : i32, i32
  }
  func.func @transform_5(%arg0: i32, %arg1: i32) -> (i32, i32) {
    %c0_i32 = arith.constant 0 : i32
    %c0_i32_0 = arith.constant 0 : i32
    %c0_i32_1 = arith.constant 0 : i32
    return %c0_i32, %c0_i32_0 : i32, i32
  }
  func.func @transform_6(%arg0: i32, %arg1: i32) -> (i32, i32, i32) {
    %c0_i32 = arith.constant 0 : i32
    %c0_i32_0 = arith.constant 0 : i32
    return %arg0, %c0_i32, %arg1 : i32, i32, i32
  }
  func.func @transform_7(%arg0: i32, %arg1: i32) -> (i32, i32, i32) {
    %c0_i32 = arith.constant 0 : i32
    %c0_i32_0 = arith.constant 0 : i32
    return %arg0, %c0_i32, %arg1 : i32, i32, i32
  }
}

module attributes {stable_mosaic.version = 11 : i64} {
  func.func @_spa_kernel(%arg0: i32, %arg1: i32, %arg2: memref<1x1x8x110xbf16, #tpu.memory_space<vmem>>, %arg3: memref<9x4x8xbf16, #tpu.memory_space<vmem>>, %arg4: memref<1x1x4x80xf32, #tpu.memory_space<vmem>>) attributes {dimension_semantics = [#tpu.dimension_semantics<parallel>, #tpu.dimension_semantics<parallel>], iteration_bounds = array<i64: 2, 4>, scalar_prefetch = 0 : i64, scratch_operands = 0 : i64, tpu.core_type = #tpu.core_type<tc>, window_params = [{transform_indices = @transform_0, window_bounds = array<i64: 1, 1, 8, 110>}, {pipeline_mode = #tpu.pipeline_mode<synchronous>, transform_indices = @transform_1, window_bounds = array<i64: 9, 4, 8>}, {transform_indices = @transform_2, window_bounds = array<i64: 1, 1, 4, 80>}]} {
    %cst = arith.constant 0.000000e+00 : f32
    %0 = vector.broadcast %cst : f32 to vector<4x80xf32>
    %c0 = arith.constant 0 : index
    %c0_0 = arith.constant 0 : index
    %c0_1 = arith.constant 0 : index
    %1 = vector.load %arg3[%c0, %c0_0, %c0_1] : memref<9x4x8xbf16, #tpu.memory_space<vmem>>, vector<1x4x8xbf16>
    %2 = vector.shape_cast %1 : vector<1x4x8xbf16> to vector<4x8xbf16>
    %c0_2 = arith.constant 0 : index
    %c0_3 = arith.constant 0 : index
    %c0_4 = arith.constant 0 : index
    %c0_5 = arith.constant 0 : index
    %3 = vector.load %arg2[%c0_2, %c0_3, %c0_4, %c0_5] : memref<1x1x8x110xbf16, #tpu.memory_space<vmem>>, vector<1x1x8x80xbf16>
    %4 = vector.shape_cast %3 : vector<1x1x8x80xbf16> to vector<8x80xbf16>
    %cst_6 = arith.constant dense<0.000000e+00> : vector<4x80xf32>
    %5 = tpu.matmul %2, %4, %cst_6 {dimension_numbers = #tpu.dot_dimension_numbers<[1], [0], [0], [1], [0, 0, 1, 1], [], []>} : vector<4x8xbf16>, vector<8x80xbf16>, vector<4x80xf32> -> vector<4x80xf32>
    %6 = arith.addf %0, %5 : vector<4x80xf32>
    %c1 = arith.constant 1 : index
    %c0_7 = arith.constant 0 : index
    %c0_8 = arith.constant 0 : index
    %7 = vector.load %arg3[%c1, %c0_7, %c0_8] : memref<9x4x8xbf16, #tpu.memory_space<vmem>>, vector<1x4x8xbf16>
    %8 = vector.shape_cast %7 : vector<1x4x8xbf16> to vector<4x8xbf16>
    %c0_9 = arith.constant 0 : index
    %c0_10 = arith.constant 0 : index
    %c0_11 = arith.constant 0 : index
    %c1_12 = arith.constant 1 : index
    %9 = vector.load %arg2[%c0_9, %c0_10, %c0_11, %c1_12] : memref<1x1x8x110xbf16, #tpu.memory_space<vmem>>, vector<1x1x8x80xbf16>
    %10 = vector.shape_cast %9 : vector<1x1x8x80xbf16> to vector<8x80xbf16>
    %cst_13 = arith.constant dense<0.000000e+00> : vector<4x80xf32>
    %11 = tpu.matmul %8, %10, %cst_13 {dimension_numbers = #tpu.dot_dimension_numbers<[1], [0], [0], [1], [0, 0, 1, 1], [], []>} : vector<4x8xbf16>, vector<8x80xbf16>, vector<4x80xf32> -> vector<4x80xf32>
    %12 = arith.addf %6, %11 : vector<4x80xf32>
    %c2 = arith.constant 2 : index
    %c0_14 = arith.constant 0 : index
    %c0_15 = arith.constant 0 : index
    %13 = vector.load %arg3[%c2, %c0_14, %c0_15] : memref<9x4x8xbf16, #tpu.memory_space<vmem>>, vector<1x4x8xbf16>
    %14 = vector.shape_cast %13 : vector<1x4x8xbf16> to vector<4x8xbf16>
    %c0_16 = arith.constant 0 : index
    %c0_17 = arith.constant 0 : index
    %c0_18 = arith.constant 0 : index
    %c2_19 = arith.constant 2 : index
    %15 = vector.load %arg2[%c0_16, %c0_17, %c0_18, %c2_19] : memref<1x1x8x110xbf16, #tpu.memory_space<vmem>>, vector<1x1x8x80xbf16>
    %16 = vector.shape_cast %15 : vector<1x1x8x80xbf16> to vector<8x80xbf16>
    %cst_20 = arith.constant dense<0.000000e+00> : vector<4x80xf32>
    %17 = tpu.matmul %14, %16, %cst_20 {dimension_numbers = #tpu.dot_dimension_numbers<[1], [0], [0], [1], [0, 0, 1, 1], [], []>} : vector<4x8xbf16>, vector<8x80xbf16>, vector<4x80xf32> -> vector<4x80xf32>
    %18 = arith.addf %12, %17 : vector<4x80xf32>
    %c3 = arith.constant 3 : index
    %c0_21 = arith.constant 0 : index
    %c0_22 = arith.constant 0 : index
    %19 = vector.load %arg3[%c3, %c0_21, %c0_22] : memref<9x4x8xbf16, #tpu.memory_space<vmem>>, vector<1x4x8xbf16>
    %20 = vector.shape_cast %19 : vector<1x4x8xbf16> to vector<4x8xbf16>
    %c0_23 = arith.constant 0 : index
    %c0_24 = arith.constant 0 : index
    %c0_25 = arith.constant 0 : index
    %c10 = arith.constant 10 : index
    %21 = vector.load %arg2[%c0_23, %c0_24, %c0_25, %c10] : memref<1x1x8x110xbf16, #tpu.memory_space<vmem>>, vector<1x1x8x80xbf16>
    %22 = vector.shape_cast %21 : vector<1x1x8x80xbf16> to vector<8x80xbf16>
    %cst_26 = arith.constant dense<0.000000e+00> : vector<4x80xf32>
    %23 = tpu.matmul %20, %22, %cst_26 {dimension_numbers = #tpu.dot_dimension_numbers<[1], [0], [0], [1], [0, 0, 1, 1], [], []>} : vector<4x8xbf16>, vector<8x80xbf16>, vector<4x80xf32> -> vector<4x80xf32>
    %24 = arith.addf %18, %23 : vector<4x80xf32>
    %c4 = arith.constant 4 : index
    %c0_27 = arith.constant 0 : index
    %c0_28 = arith.constant 0 : index
    %25 = vector.load %arg3[%c4, %c0_27, %c0_28] : memref<9x4x8xbf16, #tpu.memory_space<vmem>>, vector<1x4x8xbf16>
    %26 = vector.shape_cast %25 : vector<1x4x8xbf16> to vector<4x8xbf16>
    %c0_29 = arith.constant 0 : index
    %c0_30 = arith.constant 0 : index
    %c0_31 = arith.constant 0 : index
    %c11 = arith.constant 11 : index
    %27 = vector.load %arg2[%c0_29, %c0_30, %c0_31, %c11] : memref<1x1x8x110xbf16, #tpu.memory_space<vmem>>, vector<1x1x8x80xbf16>
    %28 = vector.shape_cast %27 : vector<1x1x8x80xbf16> to vector<8x80xbf16>
    %cst_32 = arith.constant dense<0.000000e+00> : vector<4x80xf32>
    %29 = tpu.matmul %26, %28, %cst_32 {dimension_numbers = #tpu.dot_dimension_numbers<[1], [0], [0], [1], [0, 0, 1, 1], [], []>} : vector<4x8xbf16>, vector<8x80xbf16>, vector<4x80xf32> -> vector<4x80xf32>
    %30 = arith.addf %24, %29 : vector<4x80xf32>
    %c5 = arith.constant 5 : index
    %c0_33 = arith.constant 0 : index
    %c0_34 = arith.constant 0 : index
    %31 = vector.load %arg3[%c5, %c0_33, %c0_34] : memref<9x4x8xbf16, #tpu.memory_space<vmem>>, vector<1x4x8xbf16>
    %32 = vector.shape_cast %31 : vector<1x4x8xbf16> to vector<4x8xbf16>
    %c0_35 = arith.constant 0 : index
    %c0_36 = arith.constant 0 : index
    %c0_37 = arith.constant 0 : index
    %c12 = arith.constant 12 : index
    %33 = vector.load %arg2[%c0_35, %c0_36, %c0_37, %c12] : memref<1x1x8x110xbf16, #tpu.memory_space<vmem>>, vector<1x1x8x80xbf16>
    %34 = vector.shape_cast %33 : vector<1x1x8x80xbf16> to vector<8x80xbf16>
    %cst_38 = arith.constant dense<0.000000e+00> : vector<4x80xf32>
    %35 = tpu.matmul %32, %34, %cst_38 {dimension_numbers = #tpu.dot_dimension_numbers<[1], [0], [0], [1], [0, 0, 1, 1], [], []>} : vector<4x8xbf16>, vector<8x80xbf16>, vector<4x80xf32> -> vector<4x80xf32>
    %36 = arith.addf %30, %35 : vector<4x80xf32>
    %c6 = arith.constant 6 : index
    %c0_39 = arith.constant 0 : index
    %c0_40 = arith.constant 0 : index
    %37 = vector.load %arg3[%c6, %c0_39, %c0_40] : memref<9x4x8xbf16, #tpu.memory_space<vmem>>, vector<1x4x8xbf16>
    %38 = vector.shape_cast %37 : vector<1x4x8xbf16> to vector<4x8xbf16>
    %c0_41 = arith.constant 0 : index
    %c0_42 = arith.constant 0 : index
    %c0_43 = arith.constant 0 : index
    %c20 = arith.constant 20 : index
    %39 = vector.load %arg2[%c0_41, %c0_42, %c0_43, %c20] : memref<1x1x8x110xbf16, #tpu.memory_space<vmem>>, vector<1x1x8x80xbf16>
    %40 = vector.shape_cast %39 : vector<1x1x8x80xbf16> to vector<8x80xbf16>
    %cst_44 = arith.constant dense<0.000000e+00> : vector<4x80xf32>
    %41 = tpu.matmul %38, %40, %cst_44 {dimension_numbers = #tpu.dot_dimension_numbers<[1], [0], [0], [1], [0, 0, 1, 1], [], []>} : vector<4x8xbf16>, vector<8x80xbf16>, vector<4x80xf32> -> vector<4x80xf32>
    %42 = arith.addf %36, %41 : vector<4x80xf32>
    %c7 = arith.constant 7 : index
    %c0_45 = arith.constant 0 : index
    %c0_46 = arith.constant 0 : index
    %43 = vector.load %arg3[%c7, %c0_45, %c0_46] : memref<9x4x8xbf16, #tpu.memory_space<vmem>>, vector<1x4x8xbf16>
    %44 = vector.shape_cast %43 : vector<1x4x8xbf16> to vector<4x8xbf16>
    %c0_47 = arith.constant 0 : index
    %c0_48 = arith.constant 0 : index
    %c0_49 = arith.constant 0 : index
    %c21 = arith.constant 21 : index
    %45 = vector.load %arg2[%c0_47, %c0_48, %c0_49, %c21] : memref<1x1x8x110xbf16, #tpu.memory_space<vmem>>, vector<1x1x8x80xbf16>
    %46 = vector.shape_cast %45 : vector<1x1x8x80xbf16> to vector<8x80xbf16>
    %cst_50 = arith.constant dense<0.000000e+00> : vector<4x80xf32>
    %47 = tpu.matmul %44, %46, %cst_50 {dimension_numbers = #tpu.dot_dimension_numbers<[1], [0], [0], [1], [0, 0, 1, 1], [], []>} : vector<4x8xbf16>, vector<8x80xbf16>, vector<4x80xf32> -> vector<4x80xf32>
    %48 = arith.addf %42, %47 : vector<4x80xf32>
    %c8 = arith.constant 8 : index
    %c0_51 = arith.constant 0 : index
    %c0_52 = arith.constant 0 : index
    %49 = vector.load %arg3[%c8, %c0_51, %c0_52] : memref<9x4x8xbf16, #tpu.memory_space<vmem>>, vector<1x4x8xbf16>
    %50 = vector.shape_cast %49 : vector<1x4x8xbf16> to vector<4x8xbf16>
    %c0_53 = arith.constant 0 : index
    %c0_54 = arith.constant 0 : index
    %c0_55 = arith.constant 0 : index
    %c22 = arith.constant 22 : index
    %51 = vector.load %arg2[%c0_53, %c0_54, %c0_55, %c22] : memref<1x1x8x110xbf16, #tpu.memory_space<vmem>>, vector<1x1x8x80xbf16>
    %52 = vector.shape_cast %51 : vector<1x1x8x80xbf16> to vector<8x80xbf16>
    %cst_56 = arith.constant dense<0.000000e+00> : vector<4x80xf32>
    %53 = tpu.matmul %50, %52, %cst_56 {dimension_numbers = #tpu.dot_dimension_numbers<[1], [0], [0], [1], [0, 0, 1, 1], [], []>} : vector<4x8xbf16>, vector<8x80xbf16>, vector<4x80xf32> -> vector<4x80xf32>
    %54 = arith.addf %48, %53 : vector<4x80xf32>
    %cst_57 = arith.constant 0.000000e+00 : f32
    %55 = vector.broadcast %cst_57 : f32 to vector<4x80xf32>
    %56 = arith.maximumf %54, %55 : vector<4x80xf32>
    %c0_58 = arith.constant 0 : index
    %c0_59 = arith.constant 0 : index
    %c0_60 = arith.constant 0 : index
    %c0_61 = arith.constant 0 : index
    %57 = vector.load %arg4[%c0_58, %c0_59, %c0_60, %c0_61] : memref<1x1x4x80xf32, #tpu.memory_space<vmem>>, vector<1x1x4x80xf32>
    %58 = vector.shape_cast %57 : vector<1x1x4x80xf32> to vector<4x80xf32>
    %59 = vector.shape_cast %56 : vector<4x80xf32> to vector<1x1x4x80xf32>
    tpu.vector_store %arg4[%c0_58, %c0_59, %c0_60, %c0_61], %59 {strides = array<i32>} : memref<1x1x4x80xf32, #tpu.memory_space<vmem>>, vector<1x1x4x80xf32>,
    return
  }
  func.func @transform_0(%arg0: i32, %arg1: i32) -> (i32, i32, i32, i32) {
    %c0_i32 = arith.constant 0 : i32
    %c0_i32_0 = arith.constant 0 : i32
    %c0_i32_1 = arith.constant 0 : i32
    return %arg0, %arg1, %c0_i32, %c0_i32_0 : i32, i32, i32, i32
  }
  func.func @transform_1(%arg0: i32, %arg1: i32) -> (i32, i32, i32) {
    %c0_i32 = arith.constant 0 : i32
    %c0_i32_0 = arith.constant 0 : i32
    %c0_i32_1 = arith.constant 0 : i32
    %c0_i32_2 = arith.constant 0 : i32
    return %c0_i32, %c0_i32_0, %c0_i32_1 : i32, i32, i32
  }
  func.func @transform_2(%arg0: i32, %arg1: i32) -> (i32, i32, i32, i32) {
    %c0_i32 = arith.constant 0 : i32
    %c0_i32_0 = arith.constant 0 : i32
    %c0_i32_1 = arith.constant 0 : i32
    return %arg0, %arg1, %c0_i32, %c0_i32_0 : i32, i32, i32, i32
  }
}

</mosaic_0001>

<llo_original>
// kernel: inter_block_forward.2
$region0: #{inter_block_forward.2}
  #allocation0 [shape = 'u32[]', space=smem, size = 0x4, offset = 0x4, fixed_abs, tag = 'smem constant byte address 0x4 - core index']
  #allocation1 [shape = 'u32[144,128]{1,0:T(1,128)}', space=vmem, size = 0x12000, scoped, tag = 'internal scratch']
  %s0 = inlined_call_operand.vmem [shape: bf16[2,16,128], index: 0, kind: input, shape index: {}]
  %s1 = inlined_call_operand.vmem [shape: f32[2,4,128], index: 1, kind: input, shape index: {}]
  %s2 = inlined_call_operand.vmem [shape: bf16[4,16], index: 2, kind: input, shape index: {}]
  %s3 = inlined_call_operand.vmem [shape: bf16[4,4], index: 3, kind: input, shape index: {}]
  %s4 = inlined_call_operand.vmem [shape: bf16[4,4], index: 4, kind: input, shape index: {}]
  %s5 = inlined_call_operand.vmem [shape: bf16[16,4], index: 5, kind: input, shape index: {}]
  %s6 = inlined_call_operand.vmem [shape: f32[2,4,128], index: 6, kind: output, shape index: {0}]
  %s7 = inlined_call_operand.vmem [shape: bf16[2,16,128], index: 7, kind: output, shape index: {1}]
  %8 = xla_tuple %s6, %s7
  %s9 = sld [smem:[#allocation0]]
  $region65: #{inter_block_forward.2} parent=0
    _
  %s11 = ssub.s32 1, %s9
  %s12 = scalar_select 0, %s11, %s9
  loop: start=0, step=1, limit=4
  $region2: #{inter_block_forward.2} parent=0 // loop_pre_header
    _
  $region3: #{inter_block_forward.2} parent=0 // loop_header
    %s14 = sphi 0, %s18
    %p15 = scmp.ge.s32.totalorder %s14, 4
    %s21 = sphi 0, %s33
    %s22 = sphi 0, %s29
    %s23 = sphi 0, %s21
    %s24 = sphi 0, %s22
    %s25 = sphi 0, %s23
    %s26 = sphi 0, %s24
    %s38 = sphi 0, %s40
    %s41 = sphi 0, %s38
    %s42 = sphi 0, %s41
    %s58 = sphi 0, %s42
    %s66 = sphi 0, %s68
    %s69 = sphi 0, %s66
    %s70 = sphi 0, %s69
    %s86 = sphi 0, %s70
    %s90 = sphi 0, %s90
    %s92 = sphi 0, %s90
    %s93 = sphi 0, %s92
    %s107 = sphi 0, %s93
    %s111 = sphi 0, %s111
    %s113 = sphi 0, %s111
    %s114 = sphi 0, %s113
    %s128 = sphi 0, %s114
    %s132 = sphi 0, %s132
    %s134 = sphi 0, %s132
    %s135 = sphi 0, %s134
    %s149 = sphi 0, %s135
    %s153 = sphi 0, %s153
    %s155 = sphi 0, %s153
    %s156 = sphi 0, %s155
    %s170 = sphi 0, %s156
    %s178 = sphi 0, %s180
    %s181 = sphi 0, %s178
    %s182 = sphi 0, %s181
    %s198 = sphi 0, %s182
    %s206 = sphi 0, %s208
    %s209 = sphi 0, %s206
    %s210 = sphi 0, %s209
    %s226 = sphi 0, %s210
  $region4: #{inter_block_forward.2} parent=0 // loop_header_branch
    %17 = sbr.rel (%p15) target = $region8
  $region5: #{inter_block_forward.2} parent=0 // loop_body
    %s19 = ssub.s32 %s14, 1
    %s20 = ssub.s32 %s14, 2
    %s27 = sadd.s32 1, %s22
    %p28 = scmp.ge.s32.totalorder %s27, 1
    %s29 = scalar_select %p28, 0, %s27
    %s30 = sadd.s32 1, %s21
    %s31 = scalar_select %p28, %s30, %s21
    %p32 = scmp.ge.s32.totalorder %s31, 2
    %s33 = scalar_select %p32, 0, %s31
    %s34 = ssub.s32 %s21, %s33
    %s35 = ssub.s32 %s22, %s29
    %s36 = sor.u32 %s34, %s35
    %p37 = scmp.eq.s32.totalorder %s36, 0
    %s39 = sadd.s32 %s38, 1
    %s40 = scalar_select %p37, %s38, %s39
    %p43 = pneg %p37
    %p44 = scmp.eq.s32.totalorder %s14, 1
    %p45 = por %p43, %p44
    %p46 = scmp.ne.s32.totalorder %s38, %s41
    %p47 = scmp.eq.s32.totalorder %s14, 0
    %p48 = por %p46, %p47
    %p49 = scmp.ne.s32.totalorder %s38, %s41
    %p50 = scmp.eq.s32.totalorder %s19, 1
    %p51 = por %p49, %p50
    %p52 = scmp.ne.s32.totalorder %s41, %s42
    %p53 = scmp.eq.s32.totalorder %s19, 0
    %p54 = por %p52, %p53
    %p55 = scmp.ne.s32.totalorder %s41, %s42
    %p56 = scmp.eq.s32.totalorder %s20, 1
    %p57 = por %p55, %p56
    %p59 = scmp.ne.s32.totalorder %s42, %s58
    %p60 = scmp.eq.s32.totalorder %s20, 0
    %p61 = por %p59, %p60
    %s62 = ssub.s32 %s21, %s33
    %s63 = ssub.s32 %s22, %s29
    %s64 = sor.u32 %s62, %s63
    %p65 = scmp.eq.s32.totalorder %s64, 0
    %s67 = sadd.s32 %s66, 1
    %s68 = scalar_select %p65, %s66, %s67
    %p71 = pneg %p65
    %p72 = scmp.eq.s32.totalorder %s14, 1
    %p73 = por %p71, %p72
    %p74 = scmp.ne.s32.totalorder %s66, %s69
    %p75 = scmp.eq.s32.totalorder %s14, 0
    %p76 = por %p74, %p75
    %p77 = scmp.ne.s32.totalorder %s66, %s69
    %p78 = scmp.eq.s32.totalorder %s19, 1
    %p79 = por %p77, %p78
    %p80 = scmp.ne.s32.totalorder %s69, %s70
    %p81 = scmp.eq.s32.totalorder %s19, 0
    %p82 = por %p80, %p81
    %p83 = scmp.ne.s32.totalorder %s69, %s70
    %p84 = scmp.eq.s32.totalorder %s20, 1
    %p85 = por %p83, %p84
    %p87 = scmp.ne.s32.totalorder %s70, %s86
    %p88 = scmp.eq.s32.totalorder %s20, 0
    %p89 = por %p87, %p88
    %s91 = sadd.s32 %s90, 1
    %p94 = scmp.eq.s32.totalorder %s14, 1
    %p95 = scmp.ne.s32.totalorder %s90, %s92
    %p96 = scmp.eq.s32.totalorder %s14, 0
    %p97 = por %p95, %p96
    %p98 = scmp.ne.s32.totalorder %s90, %s92
    %p99 = scmp.eq.s32.totalorder %s19, 1
    %p100 = por %p98, %p99
    %p101 = scmp.ne.s32.totalorder %s92, %s93
    %p102 = scmp.eq.s32.totalorder %s19, 0
    %p103 = por %p101, %p102
    %p104 = scmp.ne.s32.totalorder %s92, %s93
    %p105 = scmp.eq.s32.totalorder %s20, 1
    %p106 = por %p104, %p105
    %p108 = scmp.ne.s32.totalorder %s93, %s107
    %p109 = scmp.eq.s32.totalorder %s20, 0
    %p110 = por %p108, %p109
    %s112 = sadd.s32 %s111, 1
    %p115 = scmp.eq.s32.totalorder %s14, 1
    %p116 = scmp.ne.s32.totalorder %s111, %s113
    %p117 = scmp.eq.s32.totalorder %s14, 0
    %p118 = por %p116, %p117
    %p119 = scmp.ne.s32.totalorder %s111, %s113
    %p120 = scmp.eq.s32.totalorder %s19, 1
    %p121 = por %p119, %p120
    %p122 = scmp.ne.s32.totalorder %s113, %s114
    %p123 = scmp.eq.s32.totalorder %s19, 0
    %p124 = por %p122, %p123
    %p125 = scmp.ne.s32.totalorder %s113, %s114
    %p126 = scmp.eq.s32.totalorder %s20, 1
    %p127 = por %p125, %p126
    %p129 = scmp.ne.s32.totalorder %s114, %s128
    %p130 = scmp.eq.s32.totalorder %s20, 0
    %p131 = por %p129, %p130
    %s133 = sadd.s32 %s132, 1
    %p136 = scmp.eq.s32.totalorder %s14, 1
    %p137 = scmp.ne.s32.totalorder %s132, %s134
    %p138 = scmp.eq.s32.totalorder %s14, 0
    %p139 = por %p137, %p138
    %p140 = scmp.ne.s32.totalorder %s132, %s134
    %p141 = scmp.eq.s32.totalorder %s19, 1
    %p142 = por %p140, %p141
    %p143 = scmp.ne.s32.totalorder %s134, %s135
    %p144 = scmp.eq.s32.totalorder %s19, 0
    %p145 = por %p143, %p144
    %p146 = scmp.ne.s32.totalorder %s134, %s135
    %p147 = scmp.eq.s32.totalorder %s20, 1
    %p148 = por %p146, %p147
    %p150 = scmp.ne.s32.totalorder %s135, %s149
    %p151 = scmp.eq.s32.totalorder %s20, 0
    %p152 = por %p150, %p151
    %s154 = sadd.s32 %s153, 1
    %p157 = scmp.eq.s32.totalorder %s14, 1
    %p158 = scmp.ne.s32.totalorder %s153, %s155
    %p159 = scmp.eq.s32.totalorder %s14, 0
    %p160 = por %p158, %p159
    %p161 = scmp.ne.s32.totalorder %s153, %s155
    %p162 = scmp.eq.s32.totalorder %s19, 1
    %p163 = por %p161, %p162
    %p164 = scmp.ne.s32.totalorder %s155, %s156
    %p165 = scmp.eq.s32.totalorder %s19, 0
    %p166 = por %p164, %p165
    %p167 = scmp.ne.s32.totalorder %s155, %s156
    %p168 = scmp.eq.s32.totalorder %s20, 1
    %p169 = por %p167, %p168
    %p171 = scmp.ne.s32.totalorder %s156, %s170
    %p172 = scmp.eq.s32.totalorder %s20, 0
    %p173 = por %p171, %p172
    %s174 = ssub.s32 %s21, %s33
    %s175 = ssub.s32 %s22, %s29
    %s176 = sor.u32 %s174, %s175
    %p177 = scmp.eq.s32.totalorder %s176, 0
    %s179 = sadd.s32 %s178, 1
    %s180 = scalar_select %p177, %s178, %s179
    %p183 = pneg %p177
    %p184 = scmp.eq.s32.totalorder %s14, 1
    %p185 = por %p183, %p184
    %p186 = scmp.ne.s32.totalorder %s178, %s181
    %p187 = scmp.eq.s32.totalorder %s14, 0
    %p188 = por %p186, %p187
    %p189 = scmp.ne.s32.totalorder %s178, %s181
    %p190 = scmp.eq.s32.totalorder %s19, 1
    %p191 = por %p189, %p190
    %p192 = scmp.ne.s32.totalorder %s181, %s182
    %p193 = scmp.eq.s32.totalorder %s19, 0
    %p194 = por %p192, %p193
    %p195 = scmp.ne.s32.totalorder %s181, %s182
    %p196 = scmp.eq.s32.totalorder %s20, 1
    %p197 = por %p195, %p196
    %p199 = scmp.ne.s32.totalorder %s182, %s198
    %p200 = scmp.eq.s32.totalorder %s20, 0
    %p201 = por %p199, %p200
    %s202 = ssub.s32 %s21, %s33
    %s203 = ssub.s32 %s22, %s29
    %s204 = sor.u32 %s202, %s203
    %p205 = scmp.eq.s32.totalorder %s204, 0
    %s207 = sadd.s32 %s206, 1
    %s208 = scalar_select %p205, %s206, %s207
    %p211 = pneg %p205
    %p212 = scmp.eq.s32.totalorder %s14, 1
    %p213 = por %p211, %p212
    %p214 = scmp.ne.s32.totalorder %s206, %s209
    %p215 = scmp.eq.s32.totalorder %s14, 0
    %p216 = por %p214, %p215
    %p217 = scmp.ne.s32.totalorder %s206, %s209
    %p218 = scmp.eq.s32.totalorder %s19, 1
    %p219 = por %p217, %p218
    %p220 = scmp.ne.s32.totalorder %s209, %s210
    %p221 = scmp.eq.s32.totalorder %s19, 0
    %p222 = por %p220, %p221
    %p223 = scmp.ne.s32.totalorder %s209, %s210
    %p224 = scmp.eq.s32.totalorder %s20, 1
    %p225 = por %p223, %p224
    %p227 = scmp.ne.s32.totalorder %s210, %s226
    %p228 = scmp.eq.s32.totalorder %s20, 0
    %p229 = por %p227, %p228
    %p230 = scmp.le.s32.totalorder 1, %s14
    %p231 = scmp.lt.s32.totalorder %s14, 3
    %p232 = pnand %p230, %p231
    %p233 = pneg %p232
    // Predicated region
    $region9: #{inter_block_forward.2} parent=5 // pred_check
      _
    $region10: #{inter_block_forward.2} parent=5 // pred_check_branch
      %235 = sbr.rel (%p232) target = $region12
    $region11: #{inter_block_forward.2} parent=5 // pred_region
      %s236 = ssub.s32 %s14, 1
      // Predicated region
      $region13: #{inter_block_forward.2} parent=11 // pred_check
        %p237 = pneg %p103
      $region14: #{inter_block_forward.2} parent=11 // pred_check_branch
        %239 = sbr.rel (%p237) target = $region16
      $region15: #{inter_block_forward.2} parent=11 // pred_region
        _
      $region16: #{inter_block_forward.2} parent=11 // pred_fallthru
        _
      // Predicated region
      $region17: #{inter_block_forward.2} parent=11 // pred_check
        %p240 = pneg %p124
      $region18: #{inter_block_forward.2} parent=11 // pred_check_branch
        %242 = sbr.rel (%p240) target = $region20
      $region19: #{inter_block_forward.2} parent=11 // pred_region
        _
      $region20: #{inter_block_forward.2} parent=11 // pred_fallthru
        _
      // Predicated region
      $region21: #{inter_block_forward.2} parent=11 // pred_check
        %p243 = pneg %p145
      $region22: #{inter_block_forward.2} parent=11 // pred_check_branch
        %245 = sbr.rel (%p243) target = $region24
      $region23: #{inter_block_forward.2} parent=11 // pred_region
        _
      $region24: #{inter_block_forward.2} parent=11 // pred_fallthru
        _
      // Predicated region
      $region25: #{inter_block_forward.2} parent=11 // pred_check
        %p246 = pneg %p166
      $region26: #{inter_block_forward.2} parent=11 // pred_check_branch
        %248 = sbr.rel (%p246) target = $region28
      $region27: #{inter_block_forward.2} parent=11 // pred_region
        _
      $region28: #{inter_block_forward.2} parent=11 // pred_fallthru
        _
    $region12: #{inter_block_forward.2} parent=5 // pred_fallthru
      _
    %p249 = scmp.lt.s32.totalorder %s14, 2
    // Predicated region
    $region29: #{inter_block_forward.2} parent=5 // pred_check
      %p250 = pneg %p249
    $region30: #{inter_block_forward.2} parent=5 // pred_check_branch
      %252 = sbr.rel (%p250) target = $region32
    $region31: #{inter_block_forward.2} parent=5 // pred_region
      // Predicated region
      $region33: #{inter_block_forward.2} parent=31 // pred_check
        %p253 = pneg %p48
      $region34: #{inter_block_forward.2} parent=31 // pred_check_branch
        %255 = sbr.rel (%p253) target = $region36
      $region35: #{inter_block_forward.2} parent=31 // pred_region
        %p256 = scmp.lt.s32.totalorder %s21, 1
        %s257 = scalar_select %p256, %s21, 1
        %p258 = scmp.lt.s32.totalorder %s22, 0
        %s259 = scalar_select %p258, %s22, 0
        %s260 = smul.addr %s257, 2
        %s261 = sadd.s32 %s259, %s260
        %s262 = smul.addr %s261, 4
        %s263 = scalar_lea.vmem %s0, %s262
      $region36: #{inter_block_forward.2} parent=31 // pred_fallthru
        _
      // Predicated region
      $region37: #{inter_block_forward.2} parent=31 // pred_check
        %p264 = pneg %p76
      $region38: #{inter_block_forward.2} parent=31 // pred_check_branch
        %266 = sbr.rel (%p264) target = $region40
      $region39: #{inter_block_forward.2} parent=31 // pred_region
        %p267 = scmp.lt.s32.totalorder %s21, 1
        %s268 = scalar_select %p267, %s21, 1
        %p269 = scmp.lt.s32.totalorder %s22, 0
        %s270 = scalar_select %p269, %s22, 0
        %s271 = sadd.s32 %s270, %s268
        %s272 = smul.addr %s271, 4
        %s273 = scalar_lea.vmem %s1, %s272
      $region40: #{inter_block_forward.2} parent=31 // pred_fallthru
        _
    $region32: #{inter_block_forward.2} parent=5 // pred_fallthru
      _
    %p274 = scmp.le.s32.totalorder 1, %s14
    %p275 = scmp.lt.s32.totalorder %s14, 3
    %p276 = pnand %p274, %p275
    %p277 = pneg %p276
    // Predicated region
    $region41: #{inter_block_forward.2} parent=5 // pred_check
      _
    $region42: #{inter_block_forward.2} parent=5 // pred_check_branch
      %279 = sbr.rel (%p276) target = $region44
    $region43: #{inter_block_forward.2} parent=5 // pred_region
      %s280 = ssub.s32 %s14, 1
      %p281 = scmp.lt.s32.totalorder %s23, 1
      %s282 = scalar_select %p281, %s23, 1
      %p283 = scmp.lt.s32.totalorder %s24, 0
      %s284 = scalar_select %p283, %s24, 0
      %s285 = smul.addr %s282, 2
      %s286 = sadd.s32 %s284, %s285
      %s287 = smul.addr %s286, 4
      %s288 = scalar_lea.vmem %s0, %s287
      %p289 = pneg %p54
      %p290 = pneg %p51
      %p291 = scmp.lt.s32.totalorder %s23, 1
      %s292 = scalar_select %p291, %s23, 1
      %p293 = scmp.lt.s32.totalorder %s24, 0
      %s294 = scalar_select %p293, %s24, 0
      %s295 = sadd.s32 %s294, %s292
      %s296 = smul.addr %s295, 4
      %s297 = scalar_lea.vmem %s1, %s296
      %p298 = pneg %p82
      %p299 = pneg %p79
      %p300 = pneg %p103
      %p301 = pneg %p100
      %p302 = pneg %p124
      %p303 = pneg %p121
      %p304 = pneg %p145
      %p305 = pneg %p142
      %p306 = pneg %p166
      %p307 = pneg %p163
      %p308 = pneg %p194
      %p309 = pneg %p191
      %p310 = scmp.lt.s32.totalorder %s23, 1
      %s311 = scalar_select %p310, %s23, 1
      %p312 = scmp.lt.s32.totalorder %s24, 0
      %s313 = scalar_select %p312, %s24, 0
      %s314 = sadd.s32 %s313, %s311
      %s315 = smul.addr %s314, 4
      %s316 = scalar_lea.vmem %s6, %s315
      %p317 = pneg %p222
      %p318 = pneg %p219
      %p319 = scmp.lt.s32.totalorder %s23, 1
      %s320 = scalar_select %p319, %s23, 1
      %p321 = scmp.lt.s32.totalorder %s24, 0
      %s322 = scalar_select %p321, %s24, 0
      %s323 = smul.addr %s320, 2
      %s324 = sadd.s32 %s322, %s323
      %s325 = smul.addr %s324, 4
      %s326 = scalar_lea.vmem %s7, %s325
      %p327 = scmp.lt.s32.totalorder %s23, 1
      %s328 = scalar_select %p327, %s23, 1
      %p329 = scmp.lt.s32.totalorder %s24, 0
      %s330 = scalar_select %p329, %s24, 0
      %s331 = smul.addr %s328, 2
      %s332 = sadd.s32 %s330, %s331
      %s333 = smul.addr %s332, 4
      %s334 = scalar_lea.vmem %s0, %s333
      %p335 = scmp.lt.s32.totalorder %s23, 1
      %s336 = scalar_select %p335, %s23, 1
      %p337 = scmp.lt.s32.totalorder %s24, 0
      %s338 = scalar_select %p337, %s24, 0
      %s339 = sadd.s32 %s338, %s336
      %s340 = smul.addr %s339, 4
      %s341 = scalar_lea.vmem %s1, %s340
      %p342 = scmp.lt.s32.totalorder %s23, 1
      %s343 = scalar_select %p342, %s23, 1
      %p344 = scmp.lt.s32.totalorder %s24, 0
      %s345 = scalar_select %p344, %s24, 0
      %s346 = sadd.s32 %s345, %s343
      %s347 = smul.addr %s346, 4
      %s348 = scalar_lea.vmem %s6, %s347
      %p349 = scmp.lt.s32.totalorder %s23, 1
      %s350 = scalar_select %p349, %s23, 1
      %p351 = scmp.lt.s32.totalorder %s24, 0
      %s352 = scalar_select %p351, %s24, 0
      %s353 = smul.addr %s350, 2
      %s354 = sadd.s32 %s352, %s353
      %s355 = smul.addr %s354, 4
      %s356 = scalar_lea.vmem %s7, %s355
      %v358 = vld [vmem:[%s334] sm:$0xf]
      %v359 = vld [vmem:[%s334 + $0x4] sm:$0xf]
      %v360 = vld [vmem:[%s341] sm:$0xf]
      %v361 = vpack.c.bf16 %v360, %v360
      %v362 = vld [vmem:[%s2] sm:$0x3]
      %v365 = vunpack.c.l.b16 %v358
      %v366 = vunpack.c.l.b16 %v359
      %v367 = vpack.c.b16 %v366, %v365
      %vm369 = vcmask 130048
      %v371 = vsel %vm369, %v362, 0
      %373 = vmatprep.subr.bf16.mxu0 0
      %374 = vmatpush1.bf16.msra.mxu0 0
      %375 = vmatprep.subr.bf16.mxu0 0
      %376 = vmatpush1.bf16.msra.mxu0 0
      %377 = vmatprep.subr.bf16.mxu0 0
      %378 = vmatpush1.bf16.msra.mxu0 0
      %379 = vmatprep.subr.bf16.mxu0 0
      %380 = vmatpush1.bf16.msra.mxu0 0
      %381 = vmatprep.subr.bf16.mxu0 0
      %382 = vmatpush1.bf16.msra.mxu0 0
      %383 = vmatprep.subr.bf16.mxu0 0
      %384 = vmatpush1.bf16.msra.mxu0 0
      %385 = vmatprep.subr.bf16.mxu0 0
      %386 = vmatpush1.bf16.msra.mxu0 0
      %387 = vmatprep.subr.bf16.mxu0 0
      %388 = vmatpush1.bf16.msra.mxu0 %v367
      %389 = vmatprep.subr.bf16.mxu0 0
      %390 = vmatpush2.bf16.msra.mxu0 0
      %391 = vmatprep.subr.bf16.mxu0 0
      %392 = vmatpush2.bf16.msra.mxu0 0
      %393 = vmatprep.subr.bf16.mxu0 0
      %394 = vmatpush2.bf16.msra.mxu0 0
      %395 = vmatprep.subr.bf16.mxu0 0
      %396 = vmatpush2.bf16.msra.mxu0 0
      %397 = vmatprep.subr.bf16.mxu0 0
      %398 = vmatpush2.bf16.msra.mxu0 0
      %399 = vmatprep.subr.bf16.mxu0 0
      %400 = vmatpush2.bf16.msra.mxu0 0
      %401 = vmatprep.subr.bf16.mxu0 0
      %402 = vmatpush2.bf16.msra.mxu0 0
      %403 = vmatprep.subr.bf16.mxu0 0
      %404 = vmatpush2.bf16.msra.mxu0 0
      %405 = vmatprep.mubr.bf16.mxu0 0
      %406 = vmatmul.mubr.bf16.gmra.mxu0 %v371
      %v407 = vpop.f32.mrf.mxu0
      %v408 = vadd.f32 0.0, %v407
      %v409 = vpop.f32.mrf.mxu0
      %v410 = vpop.f32.mrf.mxu0
      %v411 = vpop.f32.mrf.mxu0
      %412 = vdwg.mxu0
      %v413 = vmax.f32 %v408, 0.0
      %v414 = vld [vmem:[%s5] sm:$0xf]
      %v415 = vld [vmem:[%s5 + $0x4] sm:$0xf]
      %v418 = vunpack.c.l.b16 %v414
      %v419 = vunpack.c.l.b16 %v415
      %v420 = vpack.c.b16 %v419, %v418
      %vm421 = vcmask 31744
      %v423 = vsel %vm421, %v420, 0
      %vm425 = vcmask 1041408
      %v427 = vsel %vm425, %v361, 0
      %429 = vmatprep.subr.bf16.mxu0 0
      %430 = vmatpush1.bf16.msra.mxu0 0
      %431 = vmatprep.subr.bf16.mxu0 0
      %432 = vmatpush1.bf16.msra.mxu0 0
      %433 = vmatprep.subr.bf16.mxu0 0
      %434 = vmatpush1.bf16.msra.mxu0 0
      %435 = vmatprep.subr.bf16.mxu0 0
      %436 = vmatpush1.bf16.msra.mxu0 0
      %437 = vmatprep.subr.bf16.mxu0 0
      %438 = vmatpush1.bf16.msra.mxu0 0
      %439 = vmatprep.subr.bf16.mxu0 0
      %440 = vmatpush1.bf16.msra.mxu0 0
      %441 = vmatprep.subr.bf16.mxu0 0
      %442 = vmatpush1.bf16.msra.mxu0 0
      %443 = vmatprep.subr.bf16.mxu0 0
      %444 = vmatpush1.bf16.msra.mxu0 %v427
      %445 = vmatprep.subr.bf16.mxu0 0
      %446 = vmatpush2.bf16.msra.mxu0 0
      %447 = vmatprep.subr.bf16.mxu0 0
      %448 = vmatpush2.bf16.msra.mxu0 0
      %449 = vmatprep.subr.bf16.mxu0 0
      %450 = vmatpush2.bf16.msra.mxu0 0
      %451 = vmatprep.subr.bf16.mxu0 0
      %452 = vmatpush2.bf16.msra.mxu0 0
      %453 = vmatprep.subr.bf16.mxu0 0
      %454 = vmatpush2.bf16.msra.mxu0 0
      %455 = vmatprep.subr.bf16.mxu0 0
      %456 = vmatpush2.bf16.msra.mxu0 0
      %457 = vmatprep.subr.bf16.mxu0 0
      %458 = vmatpush2.bf16.msra.mxu0 0
      %459 = vmatprep.subr.bf16.mxu0 0
      %460 = vmatpush2.bf16.msra.mxu0 0
      %461 = vmatprep.mubr.bf16.mxu0 0
      %462 = vmatmul.mubr.bf16.gmra.mxu0 %v423
      %v463 = vpop.f32.mrf.mxu0
      %v464 = vadd.f32 0.0, %v463
      %v465 = vpop.f32.mrf.mxu0
      %v466 = vpop.f32.mrf.mxu0
      %v467 = vadd.f32 0.0, %v466
      %v468 = vpop.f32.mrf.mxu0
      %469 = vdwg.mxu0
      %v470 = vpack.c.bf16 %v467, %v464
      %v472 = vunpack.c.l.b16 %v470
      %v473 = vunpack.c.h.b16 %v470
      %v474 = vpack.c.b16 %v472, %v472
      %v475 = vpack.c.b16 %v473, %v473
      %478 = vst [vmem:[%s356] sm:$0xf] %v474
      %479 = vst [vmem:[%s356 + $0x4] sm:$0xf] %v475
      %v480 = vld [vmem:[%s3] sm:$0x3]
      %v481 = vld [vmem:[%s4] sm:$0x3]
      %v482 = vpack.c.bf16 %v413, %v413
      %v484 = vsel %vm421, %v481, 0
      %v487 = vsel %vm425, %v482, 0
      %489 = vmatprep.subr.bf16.mxu0 0
      %490 = vmatpush1.bf16.msra.mxu0 0
      %491 = vmatprep.subr.bf16.mxu0 0
      %492 = vmatpush1.bf16.msra.mxu0 0
      %493 = vmatprep.subr.bf16.mxu0 0
      %494 = vmatpush1.bf16.msra.mxu0 0
      %495 = vmatprep.subr.bf16.mxu0 0
      %496 = vmatpush1.bf16.msra.mxu0 0
      %497 = vmatprep.subr.bf16.mxu0 0
      %498 = vmatpush1.bf16.msra.mxu0 0
      %499 = vmatprep.subr.bf16.mxu0 0
      %500 = vmatpush1.bf16.msra.mxu0 0
      %501 = vmatprep.subr.bf16.mxu0 0
      %502 = vmatpush1.bf16.msra.mxu0 0
      %503 = vmatprep.subr.bf16.mxu0 0
      %504 = vmatpush1.bf16.msra.mxu0 %v487
      %505 = vmatprep.subr.bf16.mxu0 0
      %506 = vmatpush2.bf16.msra.mxu0 0
      %507 = vmatprep.subr.bf16.mxu0 0
      %508 = vmatpush2.bf16.msra.mxu0 0
      %509 = vmatprep.subr.bf16.mxu0 0
      %510 = vmatpush2.bf16.msra.mxu0 0
      %511 = vmatprep.subr.bf16.mxu0 0
      %512 = vmatpush2.bf16.msra.mxu0 0
      %513 = vmatprep.subr.bf16.mxu0 0
      %514 = vmatpush2.bf16.msra.mxu0 0
      %515 = vmatprep.subr.bf16.mxu0 0
      %516 = vmatpush2.bf16.msra.mxu0 0
      %517 = vmatprep.subr.bf16.mxu0 0
      %518 = vmatpush2.bf16.msra.mxu0 0
      %519 = vmatprep.subr.bf16.mxu0 0
      %520 = vmatpush2.bf16.msra.mxu0 0
      %521 = vmatprep.mubr.bf16.mxu0 0
      %522 = vmatmul.mubr.bf16.gmra.mxu0 %v484
      %v523 = vpop.f32.mrf.mxu0
      %v524 = vadd.f32 0.0, %v523
      %v525 = vpop.f32.mrf.mxu0
      %v526 = vpop.f32.mrf.mxu0
      %v527 = vpop.f32.mrf.mxu0
      %528 = vdwg.mxu0
      %v530 = vsel %vm421, %v480, 0
      %532 = vmatprep.subr.bf16.mxu0 0
      %533 = vmatpush1.bf16.msra.mxu0 0
      %534 = vmatprep.subr.bf16.mxu0 0
      %535 = vmatpush1.bf16.msra.mxu0 0
      %536 = vmatprep.subr.bf16.mxu0 0
      %537 = vmatpush1.bf16.msra.mxu0 0
      %538 = vmatprep.subr.bf16.mxu0 0
      %539 = vmatpush1.bf16.msra.mxu0 0
      %540 = vmatprep.subr.bf16.mxu0 0
      %541 = vmatpush1.bf16.msra.mxu0 0
      %542 = vmatprep.subr.bf16.mxu0 0
      %543 = vmatpush1.bf16.msra.mxu0 0
      %544 = vmatprep.subr.bf16.mxu0 0
      %545 = vmatpush1.bf16.msra.mxu0 0
      %546 = vmatprep.subr.bf16.mxu0 0
      %547 = vmatpush1.bf16.msra.mxu0 %v427
      %548 = vmatprep.subr.bf16.mxu0 0
      %549 = vmatpush2.bf16.msra.mxu0 0
      %550 = vmatprep.subr.bf16.mxu0 0
      %551 = vmatpush2.bf16.msra.mxu0 0
      %552 = vmatprep.subr.bf16.mxu0 0
      %553 = vmatpush2.bf16.msra.mxu0 0
      %554 = vmatprep.subr.bf16.mxu0 0
      %555 = vmatpush2.bf16.msra.mxu0 0
      %556 = vmatprep.subr.bf16.mxu0 0
      %557 = vmatpush2.bf16.msra.mxu0 0
      %558 = vmatprep.subr.bf16.mxu0 0
      %559 = vmatpush2.bf16.msra.mxu0 0
      %560 = vmatprep.subr.bf16.mxu0 0
      %561 = vmatpush2.bf16.msra.mxu0 0
      %562 = vmatprep.subr.bf16.mxu0 0
      %563 = vmatpush2.bf16.msra.mxu0 0
      %564 = vmatprep.mubr.bf16.mxu0 0
      %565 = vmatmul.mubr.bf16.gmra.mxu0 %v530
      %v566 = vpop.f32.mrf.mxu0
      %v567 = vadd.f32 %v524, %v566
      %v568 = vpop.f32.mrf.mxu0
      %v569 = vpop.f32.mrf.mxu0
      %v570 = vpop.f32.mrf.mxu0
      %571 = vdwg.mxu0
      %v572 = vmax.f32 %v567, 0.0
      %v573 = vadd.f32 %v572, %v360
      %574 = vst [vmem:[%s348] sm:$0xf] %v573
      %p575 = scmp.lt.s32.totalorder %s23, 1
      %s576 = scalar_select %p575, %s23, 1
      %p577 = scmp.lt.s32.totalorder %s24, 0
      %s578 = scalar_select %p577, %s24, 0
      %s579 = sadd.s32 %s578, %s576
      %s580 = smul.addr %s579, 4
      %s581 = scalar_lea.vmem %s6, %s580
      %p582 = scmp.lt.s32.totalorder %s23, 1
      %s583 = scalar_select %p582, %s23, 1
      %p584 = scmp.lt.s32.totalorder %s24, 0
      %s585 = scalar_select %p584, %s24, 0
      %s586 = smul.addr %s583, 2
      %s587 = sadd.s32 %s585, %s586
      %s588 = smul.addr %s587, 4
      %s589 = scalar_lea.vmem %s7, %s588
      // Predicated region
      $region45: #{inter_block_forward.2} parent=43 // pred_check
        %p590 = pneg %p191
      $region46: #{inter_block_forward.2} parent=43 // pred_check_branch
        %592 = sbr.rel (%p590) target = $region48
      $region47: #{inter_block_forward.2} parent=43 // pred_region
        _
      $region48: #{inter_block_forward.2} parent=43 // pred_fallthru
        _
      // Predicated region
      $region49: #{inter_block_forward.2} parent=43 // pred_check
        %p593 = pneg %p219
      $region50: #{inter_block_forward.2} parent=43 // pred_check_branch
        %595 = sbr.rel (%p593) target = $region52
      $region51: #{inter_block_forward.2} parent=43 // pred_region
        _
      $region52: #{inter_block_forward.2} parent=43 // pred_fallthru
        _
    $region44: #{inter_block_forward.2} parent=5 // pred_fallthru
      _
    %p596 = scmp.le.s32.totalorder 2, %s14
    // Predicated region
    $region53: #{inter_block_forward.2} parent=5 // pred_check
      %p597 = pneg %p596
    $region54: #{inter_block_forward.2} parent=5 // pred_check_branch
      %599 = sbr.rel (%p597) target = $region56
    $region55: #{inter_block_forward.2} parent=5 // pred_region
      %s600 = ssub.s32 %s14, 2
      // Predicated region
      $region57: #{inter_block_forward.2} parent=55 // pred_check
        %p601 = pneg %p197
      $region58: #{inter_block_forward.2} parent=55 // pred_check_branch
        %603 = sbr.rel (%p601) target = $region60
      $region59: #{inter_block_forward.2} parent=55 // pred_region
        %p604 = scmp.lt.s32.totalorder %s25, 1
        %s605 = scalar_select %p604, %s25, 1
        %p606 = scmp.lt.s32.totalorder %s26, 0
        %s607 = scalar_select %p606, %s26, 0
        %s608 = sadd.s32 %s607, %s605
        %s609 = smul.addr %s608, 4
        %s610 = scalar_lea.vmem %s6, %s609
      $region60: #{inter_block_forward.2} parent=55 // pred_fallthru
        _
      // Predicated region
      $region61: #{inter_block_forward.2} parent=55 // pred_check
        %p611 = pneg %p225
      $region62: #{inter_block_forward.2} parent=55 // pred_check_branch
        %613 = sbr.rel (%p611) target = $region64
      $region63: #{inter_block_forward.2} parent=55 // pred_region
        %p614 = scmp.lt.s32.totalorder %s25, 1
        %s615 = scalar_select %p614, %s25, 1
        %p616 = scmp.lt.s32.totalorder %s26, 0
        %s617 = scalar_select %p616, %s26, 0
        %s618 = smul.addr %s615, 2
        %s619 = sadd.s32 %s617, %s618
        %s620 = smul.addr %s619, 4
        %s621 = scalar_lea.vmem %s7, %s620
      $region64: #{inter_block_forward.2} parent=55 // pred_fallthru
        _
    $region56: #{inter_block_forward.2} parent=5 // pred_fallthru
      _
  $region6: #{inter_block_forward.2} parent=0 // loop_footer
    %s18 = sadd.s32 1, %s14
  $region7: #{inter_block_forward.2} parent=0 // loop_footer_branch
    %13 = sbr.rel target = $region3
  $region8: #{inter_block_forward.2} parent=0 // loop_exit
    _

// kernel: inter_block_forward.3
$region0: #{inter_block_forward.3}
  #allocation0 [shape = 'u32[]', space=smem, size = 0x4, offset = 0x4, fixed_abs, tag = 'smem constant byte address 0x4 - core index']
  #allocation1 [shape = 'u32[144,128]{1,0:T(1,128)}', space=vmem, size = 0x12000, scoped, tag = 'internal scratch']
  %s0 = inlined_call_operand.vmem [shape: bf16[2,4,8,110], index: 0, kind: input, shape index: {}]
  %s1 = inlined_call_operand.vmem [shape: bf16[9,4,8], index: 1, kind: input, shape index: {}]
  %s2 = inlined_call_operand.vmem [shape: f32[2,4,4,80], index: 2, kind: output, shape index: {}]
  %s3 = sld [smem:[#allocation0]]
  $region41: #{inter_block_forward.3} parent=0
    _
  %s5 = ssub.s32 1, %s3
  %s6 = scalar_select 0, %s5, %s3
  loop: start=0, step=1, limit=10
  $region2: #{inter_block_forward.3} parent=0 // loop_pre_header
    _
  $region3: #{inter_block_forward.3} parent=0 // loop_header
    %s8 = sphi 0, %s12
    %p9 = scmp.ge.s32.totalorder %s8, 10
    %s15 = sphi 0, %s27
    %s16 = sphi 0, %s23
    %s17 = sphi 0, %s15
    %s18 = sphi 0, %s16
    %s19 = sphi 0, %s17
    %s20 = sphi 0, %s18
    %s32 = sphi 0, %s34
    %s35 = sphi 0, %s32
    %s36 = sphi 0, %s35
    %s52 = sphi 0, %s36
    %s56 = sphi 0, %s56
    %s58 = sphi 0, %s56
    %s59 = sphi 0, %s58
    %s73 = sphi 0, %s59
    %s81 = sphi 0, %s83
    %s84 = sphi 0, %s81
    %s85 = sphi 0, %s84
    %s101 = sphi 0, %s85
  $region4: #{inter_block_forward.3} parent=0 // loop_header_branch
    %11 = sbr.rel (%p9) target = $region8
  $region5: #{inter_block_forward.3} parent=0 // loop_body
    %s13 = ssub.s32 %s8, 1
    %s14 = ssub.s32 %s8, 2
    %s21 = sadd.s32 1, %s16
    %p22 = scmp.ge.s32.totalorder %s21, 4
    %s23 = scalar_select %p22, 0, %s21
    %s24 = sadd.s32 1, %s15
    %s25 = scalar_select %p22, %s24, %s15
    %p26 = scmp.ge.s32.totalorder %s25, 2
    %s27 = scalar_select %p26, 0, %s25
    %s28 = ssub.s32 %s15, %s27
    %s29 = ssub.s32 %s16, %s23
    %s30 = sor.u32 %s28, %s29
    %p31 = scmp.eq.s32.totalorder %s30, 0
    %s33 = sadd.s32 %s32, 1
    %s34 = scalar_select %p31, %s32, %s33
    %p37 = pneg %p31
    %p38 = scmp.eq.s32.totalorder %s8, 7
    %p39 = por %p37, %p38
    %p40 = scmp.ne.s32.totalorder %s32, %s35
    %p41 = scmp.eq.s32.totalorder %s8, 0
    %p42 = por %p40, %p41
    %p43 = scmp.ne.s32.totalorder %s32, %s35
    %p44 = scmp.eq.s32.totalorder %s13, 7
    %p45 = por %p43, %p44
    %p46 = scmp.ne.s32.totalorder %s35, %s36
    %p47 = scmp.eq.s32.totalorder %s13, 0
    %p48 = por %p46, %p47
    %p49 = scmp.ne.s32.totalorder %s35, %s36
    %p50 = scmp.eq.s32.totalorder %s14, 7
    %p51 = por %p49, %p50
    %p53 = scmp.ne.s32.totalorder %s36, %s52
    %p54 = scmp.eq.s32.totalorder %s14, 0
    %p55 = por %p53, %p54
    %s57 = sadd.s32 %s56, 1
    %p60 = scmp.eq.s32.totalorder %s8, 7
    %p61 = scmp.ne.s32.totalorder %s56, %s58
    %p62 = scmp.eq.s32.totalorder %s8, 0
    %p63 = por %p61, %p62
    %p64 = scmp.ne.s32.totalorder %s56, %s58
    %p65 = scmp.eq.s32.totalorder %s13, 7
    %p66 = por %p64, %p65
    %p67 = scmp.ne.s32.totalorder %s58, %s59
    %p68 = scmp.eq.s32.totalorder %s13, 0
    %p69 = por %p67, %p68
    %p70 = scmp.ne.s32.totalorder %s58, %s59
    %p71 = scmp.eq.s32.totalorder %s14, 7
    %p72 = por %p70, %p71
    %p74 = scmp.ne.s32.totalorder %s59, %s73
    %p75 = scmp.eq.s32.totalorder %s14, 0
    %p76 = por %p74, %p75
    %s77 = ssub.s32 %s15, %s27
    %s78 = ssub.s32 %s16, %s23
    %s79 = sor.u32 %s77, %s78
    %p80 = scmp.eq.s32.totalorder %s79, 0
    %s82 = sadd.s32 %s81, 1
    %s83 = scalar_select %p80, %s81, %s82
    %p86 = pneg %p80
    %p87 = scmp.eq.s32.totalorder %s8, 7
    %p88 = por %p86, %p87
    %p89 = scmp.ne.s32.totalorder %s81, %s84
    %p90 = scmp.eq.s32.totalorder %s8, 0
    %p91 = por %p89, %p90
    %p92 = scmp.ne.s32.totalorder %s81, %s84
    %p93 = scmp.eq.s32.totalorder %s13, 7
    %p94 = por %p92, %p93
    %p95 = scmp.ne.s32.totalorder %s84, %s85
    %p96 = scmp.eq.s32.totalorder %s13, 0
    %p97 = por %p95, %p96
    %p98 = scmp.ne.s32.totalorder %s84, %s85
    %p99 = scmp.eq.s32.totalorder %s14, 7
    %p100 = por %p98, %p99
    %p102 = scmp.ne.s32.totalorder %s85, %s101
    %p103 = scmp.eq.s32.totalorder %s14, 0
    %p104 = por %p102, %p103
    %p105 = scmp.le.s32.totalorder 1, %s8
    %p106 = scmp.lt.s32.totalorder %s8, 9
    %p107 = pnand %p105, %p106
    %p108 = pneg %p107
    // Predicated region
    $region9: #{inter_block_forward.3} parent=5 // pred_check
      _
    $region10: #{inter_block_forward.3} parent=5 // pred_check_branch
      %110 = sbr.rel (%p107) target = $region12
    $region11: #{inter_block_forward.3} parent=5 // pred_region
      %s111 = ssub.s32 %s8, 1
      // Predicated region
      $region13: #{inter_block_forward.3} parent=11 // pred_check
        %p112 = pneg %p69
      $region14: #{inter_block_forward.3} parent=11 // pred_check_branch
        %114 = sbr.rel (%p112) target = $region16
      $region15: #{inter_block_forward.3} parent=11 // pred_region
        _
      $region16: #{inter_block_forward.3} parent=11 // pred_fallthru
        _
    $region12: #{inter_block_forward.3} parent=5 // pred_fallthru
      _
    %p115 = scmp.lt.s32.totalorder %s8, 8
    // Predicated region
    $region17: #{inter_block_forward.3} parent=5 // pred_check
      %p116 = pneg %p115
    $region18: #{inter_block_forward.3} parent=5 // pred_check_branch
      %118 = sbr.rel (%p116) target = $region20
    $region19: #{inter_block_forward.3} parent=5 // pred_region
      // Predicated region
      $region21: #{inter_block_forward.3} parent=19 // pred_check
        %p119 = pneg %p42
      $region22: #{inter_block_forward.3} parent=19 // pred_check_branch
        %121 = sbr.rel (%p119) target = $region24
      $region23: #{inter_block_forward.3} parent=19 // pred_region
        %p122 = scmp.lt.s32.totalorder %s15, 1
        %s123 = scalar_select %p122, %s15, 1
        %p124 = scmp.lt.s32.totalorder %s16, 3
        %s125 = scalar_select %p124, %s16, 3
        %s126 = smul.addr %s123, 4
        %s127 = sadd.s32 %s125, %s126
        %s128 = smul.addr %s127, 4
        %s129 = scalar_lea.vmem %s0, %s128
      $region24: #{inter_block_forward.3} parent=19 // pred_fallthru
        _
    $region20: #{inter_block_forward.3} parent=5 // pred_fallthru
      _
    %p130 = scmp.le.s32.totalorder 1, %s8
    %p131 = scmp.lt.s32.totalorder %s8, 9
    %p132 = pnand %p130, %p131
    %p133 = pneg %p132
    // Predicated region
    $region25: #{inter_block_forward.3} parent=5 // pred_check
      _
    $region26: #{inter_block_forward.3} parent=5 // pred_check_branch
      %135 = sbr.rel (%p132) target = $region28
    $region27: #{inter_block_forward.3} parent=5 // pred_region
      %s136 = ssub.s32 %s8, 1
      %p137 = scmp.lt.s32.totalorder %s17, 1
      %s138 = scalar_select %p137, %s17, 1
      %p139 = scmp.lt.s32.totalorder %s18, 3
      %s140 = scalar_select %p139, %s18, 3
      %s141 = smul.addr %s138, 4
      %s142 = sadd.s32 %s140, %s141
      %s143 = smul.addr %s142, 4
      %s144 = scalar_lea.vmem %s0, %s143
      %p145 = pneg %p48
      %p146 = pneg %p45
      %p147 = pneg %p69
      %p148 = pneg %p66
      %p149 = pneg %p97
      %p150 = pneg %p94
      %p151 = scmp.lt.s32.totalorder %s17, 1
      %s152 = scalar_select %p151, %s17, 1
      %p153 = scmp.lt.s32.totalorder %s18, 3
      %s154 = scalar_select %p153, %s18, 3
      %s155 = smul.addr %s152, 4
      %s156 = sadd.s32 %s154, %s155
      %s157 = smul.addr %s156, 4
      %s158 = scalar_lea.vmem %s2, %s157
      %p159 = scmp.lt.s32.totalorder %s17, 1
      %s160 = scalar_select %p159, %s17, 1
      %p161 = scmp.lt.s32.totalorder %s18, 3
      %s162 = scalar_select %p161, %s18, 3
      %s163 = smul.addr %s160, 4
      %s164 = sadd.s32 %s162, %s163
      %s165 = smul.addr %s164, 4
      %s166 = scalar_lea.vmem %s0, %s165
      %p167 = scmp.lt.s32.totalorder %s17, 1
      %s168 = scalar_select %p167, %s17, 1
      %p169 = scmp.lt.s32.totalorder %s18, 3
      %s170 = scalar_select %p169, %s18, 3
      %s171 = smul.addr %s168, 4
      %s172 = sadd.s32 %s170, %s171
      %s173 = smul.addr %s172, 4
      %s174 = scalar_lea.vmem %s2, %s173
      %v176 = vld [vmem:[%s1] sm:$0x3]
      %v177 = vld [vmem:[%s166] sm:$0xf]
      %s178 = scalar_lea.vmem %s1, 2
      %v179 = vld [vmem:[%s178] sm:$0x3]
      %v181 = vunpack.c.l.b16 %v177
      %v182 = vpack.c.b16 %v181, %v181
      %183 = vrot.lane.b32.xlu0 %v182, 127
      %v184 = vpop.permute.xlu0 %183
      %vm185 = vcmask 64512
      %v187 = vsel %vm185, %v179, 0
      %vm189 = vcmask 1043456
      %v191 = vsel %vm189, %v184, 0
      %193 = vmatprep.subr.bf16.mxu0 0
      %194 = vmatpush1.bf16.msra.mxu0 0
      %195 = vmatprep.subr.bf16.mxu0 0
      %196 = vmatpush1.bf16.msra.mxu0 0
      %197 = vmatprep.subr.bf16.mxu0 0
      %198 = vmatpush1.bf16.msra.mxu0 0
      %199 = vmatprep.subr.bf16.mxu0 0
      %200 = vmatpush1.bf16.msra.mxu0 0
      %201 = vmatprep.subr.bf16.mxu0 0
      %202 = vmatpush1.bf16.msra.mxu0 0
      %203 = vmatprep.subr.bf16.mxu0 0
      %204 = vmatpush1.bf16.msra.mxu0 0
      %205 = vmatprep.subr.bf16.mxu0 0
      %206 = vmatpush1.bf16.msra.mxu0 0
      %207 = vmatprep.subr.bf16.mxu0 0
      %208 = vmatpush1.bf16.msra.mxu0 %v191
      %209 = vmatprep.subr.bf16.mxu0 0
      %210 = vmatpush2.bf16.msra.mxu0 0
      %211 = vmatprep.subr.bf16.mxu0 0
      %212 = vmatpush2.bf16.msra.mxu0 0
      %213 = vmatprep.subr.bf16.mxu0 0
      %214 = vmatpush2.bf16.msra.mxu0 0
      %215 = vmatprep.subr.bf16.mxu0 0
      %216 = vmatpush2.bf16.msra.mxu0 0
      %217 = vmatprep.subr.bf16.mxu0 0
      %218 = vmatpush2.bf16.msra.mxu0 0
      %219 = vmatprep.subr.bf16.mxu0 0
      %220 = vmatpush2.bf16.msra.mxu0 0
      %221 = vmatprep.subr.bf16.mxu0 0
      %222 = vmatpush2.bf16.msra.mxu0 0
      %223 = vmatprep.subr.bf16.mxu0 0
      %224 = vmatpush2.bf16.msra.mxu0 0
      %225 = vmatprep.mubr.bf16.mxu0 0
      %226 = vmatmul.mubr.bf16.gmra.mxu0 %v187
      %v227 = vpop.f32.mrf.mxu0
      %v228 = vadd.f32 0.0, %v227
      %v229 = vpop.f32.mrf.mxu0
      %v230 = vpop.f32.mrf.mxu0
      %v231 = vpop.f32.mrf.mxu0
      %232 = vdwg.mxu0
      %v234 = vsel %vm185, %v176, 0
      %v237 = vsel %vm189, %v177, 0
      %239 = vmatprep.subr.bf16.mxu0 0
      %240 = vmatpush1.bf16.msra.mxu0 0
      %241 = vmatprep.subr.bf16.mxu0 0
      %242 = vmatpush1.bf16.msra.mxu0 0
      %243 = vmatprep.subr.bf16.mxu0 0
      %244 = vmatpush1.bf16.msra.mxu0 0
      %245 = vmatprep.subr.bf16.mxu0 0
      %246 = vmatpush1.bf16.msra.mxu0 0
      %247 = vmatprep.subr.bf16.mxu0 0
      %248 = vmatpush1.bf16.msra.mxu0 0
      %249 = vmatprep.subr.bf16.mxu0 0
      %250 = vmatpush1.bf16.msra.mxu0 0
      %251 = vmatprep.subr.bf16.mxu0 0
      %252 = vmatpush1.bf16.msra.mxu0 0
      %253 = vmatprep.subr.bf16.mxu0 0
      %254 = vmatpush1.bf16.msra.mxu0 %v237
      %255 = vmatprep.subr.bf16.mxu0 0
      %256 = vmatpush2.bf16.msra.mxu0 0
      %257 = vmatprep.subr.bf16.mxu0 0
      %258 = vmatpush2.bf16.msra.mxu0 0
      %259 = vmatprep.subr.bf16.mxu0 0
      %260 = vmatpush2.bf16.msra.mxu0 0
      %261 = vmatprep.subr.bf16.mxu0 0
      %262 = vmatpush2.bf16.msra.mxu0 0
      %263 = vmatprep.subr.bf16.mxu0 0
      %264 = vmatpush2.bf16.msra.mxu0 0
      %265 = vmatprep.subr.bf16.mxu0 0
      %266 = vmatpush2.bf16.msra.mxu0 0
      %267 = vmatprep.subr.bf16.mxu0 0
      %268 = vmatpush2.bf16.msra.mxu0 0
      %269 = vmatprep.subr.bf16.mxu0 0
      %270 = vmatpush2.bf16.msra.mxu0 0
      %271 = vmatprep.mubr.bf16.mxu0 0
      %272 = vmatmul.mubr.bf16.gmra.mxu0 %v234
      %v273 = vpop.f32.mrf.mxu0
      %v274 = vadd.f32 %v228, %v273
      %v275 = vpop.f32.mrf.mxu0
      %v276 = vpop.f32.mrf.mxu0
      %v277 = vpop.f32.mrf.mxu0
      %278 = vdwg.mxu0
      %s279 = scalar_lea.vmem %s1, 4
      %v280 = vld [vmem:[%s279] sm:$0x3]
      %281 = vrot.lane.b32.xlu0 %v182, 126
      %v282 = vpop.permute.xlu0 %281
      %v284 = vsel %vm185, %v280, 0
      %v287 = vsel %vm189, %v282, 0
      %289 = vmatprep.subr.bf16.mxu0 0
      %290 = vmatpush1.bf16.msra.mxu0 0
      %291 = vmatprep.subr.bf16.mxu0 0
      %292 = vmatpush1.bf16.msra.mxu0 0
      %293 = vmatprep.subr.bf16.mxu0 0
      %294 = vmatpush1.bf16.msra.mxu0 0
      %295 = vmatprep.subr.bf16.mxu0 0
      %296 = vmatpush1.bf16.msra.mxu0 0
      %297 = vmatprep.subr.bf16.mxu0 0
      %298 = vmatpush1.bf16.msra.mxu0 0
      %299 = vmatprep.subr.bf16.mxu0 0
      %300 = vmatpush1.bf16.msra.mxu0 0
      %301 = vmatprep.subr.bf16.mxu0 0
      %302 = vmatpush1.bf16.msra.mxu0 0
      %303 = vmatprep.subr.bf16.mxu0 0
      %304 = vmatpush1.bf16.msra.mxu0 %v287
      %305 = vmatprep.subr.bf16.mxu0 0
      %306 = vmatpush2.bf16.msra.mxu0 0
      %307 = vmatprep.subr.bf16.mxu0 0
      %308 = vmatpush2.bf16.msra.mxu0 0
      %309 = vmatprep.subr.bf16.mxu0 0
      %310 = vmatpush2.bf16.msra.mxu0 0
      %311 = vmatprep.subr.bf16.mxu0 0
      %312 = vmatpush2.bf16.msra.mxu0 0
      %313 = vmatprep.subr.bf16.mxu0 0
      %314 = vmatpush2.bf16.msra.mxu0 0
      %315 = vmatprep.subr.bf16.mxu0 0
      %316 = vmatpush2.bf16.msra.mxu0 0
      %317 = vmatprep.subr.bf16.mxu0 0
      %318 = vmatpush2.bf16.msra.mxu0 0
      %319 = vmatprep.subr.bf16.mxu0 0
      %320 = vmatpush2.bf16.msra.mxu0 0
      %321 = vmatprep.mubr.bf16.mxu0 0
      %322 = vmatmul.mubr.bf16.gmra.mxu0 %v284
      %v323 = vpop.f32.mrf.mxu0
      %v324 = vadd.f32 0.0, %v323
      %v325 = vpop.f32.mrf.mxu0
      %v326 = vpop.f32.mrf.mxu0
      %v327 = vpop.f32.mrf.mxu0
      %328 = vdwg.mxu0
      %v329 = vadd.f32 %v274, %v324
      %s330 = scalar_lea.vmem %s1, 6
      %v331 = vld [vmem:[%s330] sm:$0x3]
      %332 = vrot.lane.b32.xlu0 %v182, 118
      %v333 = vpop.permute.xlu0 %332
      %v335 = vsel %vm185, %v331, 0
      %v338 = vsel %vm189, %v333, 0
      %340 = vmatprep.subr.bf16.mxu0 0
      %341 = vmatpush1.bf16.msra.mxu0 0
      %342 = vmatprep.subr.bf16.mxu0 0
      %343 = vmatpush1.bf16.msra.mxu0 0
      %344 = vmatprep.subr.bf16.mxu0 0
      %345 = vmatpush1.bf16.msra.mxu0 0
      %346 = vmatprep.subr.bf16.mxu0 0
      %347 = vmatpush1.bf16.msra.mxu0 0
      %348 = vmatprep.subr.bf16.mxu0 0
      %349 = vmatpush1.bf16.msra.mxu0 0
      %350 = vmatprep.subr.bf16.mxu0 0
      %351 = vmatpush1.bf16.msra.mxu0 0
      %352 = vmatprep.subr.bf16.mxu0 0
      %353 = vmatpush1.bf16.msra.mxu0 0
      %354 = vmatprep.subr.bf16.mxu0 0
      %355 = vmatpush1.bf16.msra.mxu0 %v338
      %356 = vmatprep.subr.bf16.mxu0 0
      %357 = vmatpush2.bf16.msra.mxu0 0
      %358 = vmatprep.subr.bf16.mxu0 0
      %359 = vmatpush2.bf16.msra.mxu0 0
      %360 = vmatprep.subr.bf16.mxu0 0
      %361 = vmatpush2.bf16.msra.mxu0 0
      %362 = vmatprep.subr.bf16.mxu0 0
      %363 = vmatpush2.bf16.msra.mxu0 0
      %364 = vmatprep.subr.bf16.mxu0 0
      %365 = vmatpush2.bf16.msra.mxu0 0
      %366 = vmatprep.subr.bf16.mxu0 0
      %367 = vmatpush2.bf16.msra.mxu0 0
      %368 = vmatprep.subr.bf16.mxu0 0
      %369 = vmatpush2.bf16.msra.mxu0 0
      %370 = vmatprep.subr.bf16.mxu0 0
      %371 = vmatpush2.bf16.msra.mxu0 0
      %372 = vmatprep.mubr.bf16.mxu0 0
      %373 = vmatmul.mubr.bf16.gmra.mxu0 %v335
      %v374 = vpop.f32.mrf.mxu0
      %v375 = vadd.f32 0.0, %v374
      %v376 = vpop.f32.mrf.mxu0
      %v377 = vpop.f32.mrf.mxu0
      %v378 = vpop.f32.mrf.mxu0
      %379 = vdwg.mxu0
      %v380 = vadd.f32 %v329, %v375
      %s381 = scalar_lea.vmem %s1, 8
      %v382 = vld [vmem:[%s381] sm:$0x3]
      %383 = vrot.lane.b32.xlu0 %v182, 117
      %v384 = vpop.permute.xlu0 %383
      %v386 = vsel %vm185, %v382, 0
      %v389 = vsel %vm189, %v384, 0
      %391 = vmatprep.subr.bf16.mxu0 0
      %392 = vmatpush1.bf16.msra.mxu0 0
      %393 = vmatprep.subr.bf16.mxu0 0
      %394 = vmatpush1.bf16.msra.mxu0 0
      %395 = vmatprep.subr.bf16.mxu0 0
      %396 = vmatpush1.bf16.msra.mxu0 0
      %397 = vmatprep.subr.bf16.mxu0 0
      %398 = vmatpush1.bf16.msra.mxu0 0
      %399 = vmatprep.subr.bf16.mxu0 0
      %400 = vmatpush1.bf16.msra.mxu0 0
      %401 = vmatprep.subr.bf16.mxu0 0
      %402 = vmatpush1.bf16.msra.mxu0 0
      %403 = vmatprep.subr.bf16.mxu0 0
      %404 = vmatpush1.bf16.msra.mxu0 0
      %405 = vmatprep.subr.bf16.mxu0 0
      %406 = vmatpush1.bf16.msra.mxu0 %v389
      %407 = vmatprep.subr.bf16.mxu0 0
      %408 = vmatpush2.bf16.msra.mxu0 0
      %409 = vmatprep.subr.bf16.mxu0 0
      %410 = vmatpush2.bf16.msra.mxu0 0
      %411 = vmatprep.subr.bf16.mxu0 0
      %412 = vmatpush2.bf16.msra.mxu0 0
      %413 = vmatprep.subr.bf16.mxu0 0
      %414 = vmatpush2.bf16.msra.mxu0 0
      %415 = vmatprep.subr.bf16.mxu0 0
      %416 = vmatpush2.bf16.msra.mxu0 0
      %417 = vmatprep.subr.bf16.mxu0 0
      %418 = vmatpush2.bf16.msra.mxu0 0
      %419 = vmatprep.subr.bf16.mxu0 0
      %420 = vmatpush2.bf16.msra.mxu0 0
      %421 = vmatprep.subr.bf16.mxu0 0
      %422 = vmatpush2.bf16.msra.mxu0 0
      %423 = vmatprep.mubr.bf16.mxu0 0
      %424 = vmatmul.mubr.bf16.gmra.mxu0 %v386
      %v425 = vpop.f32.mrf.mxu0
      %v426 = vadd.f32 0.0, %v425
      %v427 = vpop.f32.mrf.mxu0
      %v428 = vpop.f32.mrf.mxu0
      %v429 = vpop.f32.mrf.mxu0
      %430 = vdwg.mxu0
      %v431 = vadd.f32 %v380, %v426
      %s432 = scalar_lea.vmem %s1, 10
      %v433 = vld [vmem:[%s432] sm:$0x3]
      %434 = vrot.lane.b32.xlu0 %v182, 116
      %v435 = vpop.permute.xlu0 %434
      %v437 = vsel %vm185, %v433, 0
      %v440 = vsel %vm189, %v435, 0
      %442 = vmatprep.subr.bf16.mxu0 0
      %443 = vmatpush1.bf16.msra.mxu0 0
      %444 = vmatprep.subr.bf16.mxu0 0
      %445 = vmatpush1.bf16.msra.mxu0 0
      %446 = vmatprep.subr.bf16.mxu0 0
      %447 = vmatpush1.bf16.msra.mxu0 0
      %448 = vmatprep.subr.bf16.mxu0 0
      %449 = vmatpush1.bf16.msra.mxu0 0
      %450 = vmatprep.subr.bf16.mxu0 0
      %451 = vmatpush1.bf16.msra.mxu0 0
      %452 = vmatprep.subr.bf16.mxu0 0
      %453 = vmatpush1.bf16.msra.mxu0 0
      %454 = vmatprep.subr.bf16.mxu0 0
      %455 = vmatpush1.bf16.msra.mxu0 0
      %456 = vmatprep.subr.bf16.mxu0 0
      %457 = vmatpush1.bf16.msra.mxu0 %v440
      %458 = vmatprep.subr.bf16.mxu0 0
      %459 = vmatpush2.bf16.msra.mxu0 0
      %460 = vmatprep.subr.bf16.mxu0 0
      %461 = vmatpush2.bf16.msra.mxu0 0
      %462 = vmatprep.subr.bf16.mxu0 0
      %463 = vmatpush2.bf16.msra.mxu0 0
      %464 = vmatprep.subr.bf16.mxu0 0
      %465 = vmatpush2.bf16.msra.mxu0 0
      %466 = vmatprep.subr.bf16.mxu0 0
      %467 = vmatpush2.bf16.msra.mxu0 0
      %468 = vmatprep.subr.bf16.mxu0 0
      %469 = vmatpush2.bf16.msra.mxu0 0
      %470 = vmatprep.subr.bf16.mxu0 0
      %471 = vmatpush2.bf16.msra.mxu0 0
      %472 = vmatprep.subr.bf16.mxu0 0
      %473 = vmatpush2.bf16.msra.mxu0 0
      %474 = vmatprep.mubr.bf16.mxu0 0
      %475 = vmatmul.mubr.bf16.gmra.mxu0 %v437
      %v476 = vpop.f32.mrf.mxu0
      %v477 = vadd.f32 0.0, %v476
      %v478 = vpop.f32.mrf.mxu0
      %v479 = vpop.f32.mrf.mxu0
      %v480 = vpop.f32.mrf.mxu0
      %481 = vdwg.mxu0
      %v482 = vadd.f32 %v431, %v477
      %s483 = scalar_lea.vmem %s1, 12
      %v484 = vld [vmem:[%s483] sm:$0x3]
      %485 = vrot.lane.b32.xlu0 %v182, 108
      %v486 = vpop.permute.xlu0 %485
      %v488 = vsel %vm185, %v484, 0
      %v491 = vsel %vm189, %v486, 0
      %493 = vmatprep.subr.bf16.mxu0 0
      %494 = vmatpush1.bf16.msra.mxu0 0
      %495 = vmatprep.subr.bf16.mxu0 0
      %496 = vmatpush1.bf16.msra.mxu0 0
      %497 = vmatprep.subr.bf16.mxu0 0
      %498 = vmatpush1.bf16.msra.mxu0 0
      %499 = vmatprep.subr.bf16.mxu0 0
      %500 = vmatpush1.bf16.msra.mxu0 0
      %501 = vmatprep.subr.bf16.mxu0 0
      %502 = vmatpush1.bf16.msra.mxu0 0
      %503 = vmatprep.subr.bf16.mxu0 0
      %504 = vmatpush1.bf16.msra.mxu0 0
      %505 = vmatprep.subr.bf16.mxu0 0
      %506 = vmatpush1.bf16.msra.mxu0 0
      %507 = vmatprep.subr.bf16.mxu0 0
      %508 = vmatpush1.bf16.msra.mxu0 %v491
      %509 = vmatprep.subr.bf16.mxu0 0
      %510 = vmatpush2.bf16.msra.mxu0 0
      %511 = vmatprep.subr.bf16.mxu0 0
      %512 = vmatpush2.bf16.msra.mxu0 0
      %513 = vmatprep.subr.bf16.mxu0 0
      %514 = vmatpush2.bf16.msra.mxu0 0
      %515 = vmatprep.subr.bf16.mxu0 0
      %516 = vmatpush2.bf16.msra.mxu0 0
      %517 = vmatprep.subr.bf16.mxu0 0
      %518 = vmatpush2.bf16.msra.mxu0 0
      %519 = vmatprep.subr.bf16.mxu0 0
      %520 = vmatpush2.bf16.msra.mxu0 0
      %521 = vmatprep.subr.bf16.mxu0 0
      %522 = vmatpush2.bf16.msra.mxu0 0
      %523 = vmatprep.subr.bf16.mxu0 0
      %524 = vmatpush2.bf16.msra.mxu0 0
      %525 = vmatprep.mubr.bf16.mxu0 0
      %526 = vmatmul.mubr.bf16.gmra.mxu0 %v488
      %v527 = vpop.f32.mrf.mxu0
      %v528 = vadd.f32 0.0, %v527
      %v529 = vpop.f32.mrf.mxu0
      %v530 = vpop.f32.mrf.mxu0
      %v531 = vpop.f32.mrf.mxu0
      %532 = vdwg.mxu0
      %v533 = vadd.f32 %v482, %v528
      %s534 = scalar_lea.vmem %s1, 14
      %v535 = vld [vmem:[%s534] sm:$0x3]
      %536 = vrot.lane.b32.xlu0 %v182, 107
      %v537 = vpop.permute.xlu0 %536
      %v539 = vsel %vm185, %v535, 0
      %v542 = vsel %vm189, %v537, 0
      %544 = vmatprep.subr.bf16.mxu0 0
      %545 = vmatpush1.bf16.msra.mxu0 0
      %546 = vmatprep.subr.bf16.mxu0 0
      %547 = vmatpush1.bf16.msra.mxu0 0
      %548 = vmatprep.subr.bf16.mxu0 0
      %549 = vmatpush1.bf16.msra.mxu0 0
      %550 = vmatprep.subr.bf16.mxu0 0
      %551 = vmatpush1.bf16.msra.mxu0 0
      %552 = vmatprep.subr.bf16.mxu0 0
      %553 = vmatpush1.bf16.msra.mxu0 0
      %554 = vmatprep.subr.bf16.mxu0 0
      %555 = vmatpush1.bf16.msra.mxu0 0
      %556 = vmatprep.subr.bf16.mxu0 0
      %557 = vmatpush1.bf16.msra.mxu0 0
      %558 = vmatprep.subr.bf16.mxu0 0
      %559 = vmatpush1.bf16.msra.mxu0 %v542
      %560 = vmatprep.subr.bf16.mxu0 0
      %561 = vmatpush2.bf16.msra.mxu0 0
      %562 = vmatprep.subr.bf16.mxu0 0
      %563 = vmatpush2.bf16.msra.mxu0 0
      %564 = vmatprep.subr.bf16.mxu0 0
      %565 = vmatpush2.bf16.msra.mxu0 0
      %566 = vmatprep.subr.bf16.mxu0 0
      %567 = vmatpush2.bf16.msra.mxu0 0
      %568 = vmatprep.subr.bf16.mxu0 0
      %569 = vmatpush2.bf16.msra.mxu0 0
      %570 = vmatprep.subr.bf16.mxu0 0
      %571 = vmatpush2.bf16.msra.mxu0 0
      %572 = vmatprep.subr.bf16.mxu0 0
      %573 = vmatpush2.bf16.msra.mxu0 0
      %574 = vmatprep.subr.bf16.mxu0 0
      %575 = vmatpush2.bf16.msra.mxu0 0
      %576 = vmatprep.mubr.bf16.mxu0 0
      %577 = vmatmul.mubr.bf16.gmra.mxu0 %v539
      %v578 = vpop.f32.mrf.mxu0
      %v579 = vadd.f32 0.0, %v578
      %v580 = vpop.f32.mrf.mxu0
      %v581 = vpop.f32.mrf.mxu0
      %v582 = vpop.f32.mrf.mxu0
      %583 = vdwg.mxu0
      %v584 = vadd.f32 %v533, %v579
      %s585 = scalar_lea.vmem %s1, 16
      %v586 = vld [vmem:[%s585] sm:$0x3]
      %587 = vrot.lane.b32.xlu0 %v182, 106
      %v588 = vpop.permute.xlu0 %587
      %v590 = vsel %vm185, %v586, 0
      %v593 = vsel %vm189, %v588, 0
      %595 = vmatprep.subr.bf16.mxu0 0
      %596 = vmatpush1.bf16.msra.mxu0 0
      %597 = vmatprep.subr.bf16.mxu0 0
      %598 = vmatpush1.bf16.msra.mxu0 0
      %599 = vmatprep.subr.bf16.mxu0 0
      %600 = vmatpush1.bf16.msra.mxu0 0
      %601 = vmatprep.subr.bf16.mxu0 0
      %602 = vmatpush1.bf16.msra.mxu0 0
      %603 = vmatprep.subr.bf16.mxu0 0
      %604 = vmatpush1.bf16.msra.mxu0 0
      %605 = vmatprep.subr.bf16.mxu0 0
      %606 = vmatpush1.bf16.msra.mxu0 0
      %607 = vmatprep.subr.bf16.mxu0 0
      %608 = vmatpush1.bf16.msra.mxu0 0
      %609 = vmatprep.subr.bf16.mxu0 0
      %610 = vmatpush1.bf16.msra.mxu0 %v593
      %611 = vmatprep.subr.bf16.mxu0 0
      %612 = vmatpush2.bf16.msra.mxu0 0
      %613 = vmatprep.subr.bf16.mxu0 0
      %614 = vmatpush2.bf16.msra.mxu0 0
      %615 = vmatprep.subr.bf16.mxu0 0
      %616 = vmatpush2.bf16.msra.mxu0 0
      %617 = vmatprep.subr.bf16.mxu0 0
      %618 = vmatpush2.bf16.msra.mxu0 0
      %619 = vmatprep.subr.bf16.mxu0 0
      %620 = vmatpush2.bf16.msra.mxu0 0
      %621 = vmatprep.subr.bf16.mxu0 0
      %622 = vmatpush2.bf16.msra.mxu0 0
      %623 = vmatprep.subr.bf16.mxu0 0
      %624 = vmatpush2.bf16.msra.mxu0 0
      %625 = vmatprep.subr.bf16.mxu0 0
      %626 = vmatpush2.bf16.msra.mxu0 0
      %627 = vmatprep.mubr.bf16.mxu0 0
      %628 = vmatmul.mubr.bf16.gmra.mxu0 %v590
      %v629 = vpop.f32.mrf.mxu0
      %v630 = vadd.f32 0.0, %v629
      %v631 = vpop.f32.mrf.mxu0
      %v632 = vpop.f32.mrf.mxu0
      %v633 = vpop.f32.mrf.mxu0
      %634 = vdwg.mxu0
      %v635 = vadd.f32 %v584, %v630
      %v636 = vmax.f32 %v635, 0.0
      %vm637 = vcmask 650240
      %638 = vst.msk [vmem:[%s174] sm:$0xf] %vm637, %v636
      %p639 = scmp.lt.s32.totalorder %s17, 1
      %s640 = scalar_select %p639, %s17, 1
      %p641 = scmp.lt.s32.totalorder %s18, 3
      %s642 = scalar_select %p641, %s18, 3
      %s643 = smul.addr %s640, 4
      %s644 = sadd.s32 %s642, %s643
      %s645 = smul.addr %s644, 4
      %s646 = scalar_lea.vmem %s2, %s645
      // Predicated region
      $region29: #{inter_block_forward.3} parent=27 // pred_check
        %p647 = pneg %p94
      $region30: #{inter_block_forward.3} parent=27 // pred_check_branch
        %649 = sbr.rel (%p647) target = $region32
      $region31: #{inter_block_forward.3} parent=27 // pred_region
        _
      $region32: #{inter_block_forward.3} parent=27 // pred_fallthru
        _
    $region28: #{inter_block_forward.3} parent=5 // pred_fallthru
      _
    %p650 = scmp.le.s32.totalorder 2, %s8
    // Predicated region
    $region33: #{inter_block_forward.3} parent=5 // pred_check
      %p651 = pneg %p650
    $region34: #{inter_block_forward.3} parent=5 // pred_check_branch
      %653 = sbr.rel (%p651) target = $region36
    $region35: #{inter_block_forward.3} parent=5 // pred_region
      %s654 = ssub.s32 %s8, 2
      // Predicated region
      $region37: #{inter_block_forward.3} parent=35 // pred_check
        %p655 = pneg %p100
      $region38: #{inter_block_forward.3} parent=35 // pred_check_branch
        %657 = sbr.rel (%p655) target = $region40
      $region39: #{inter_block_forward.3} parent=35 // pred_region
        %p658 = scmp.lt.s32.totalorder %s19, 1
        %s659 = scalar_select %p658, %s19, 1
        %p660 = scmp.lt.s32.totalorder %s20, 3
        %s661 = scalar_select %p660, %s20, 3
        %s662 = smul.addr %s659, 4
        %s663 = sadd.s32 %s661, %s662
        %s664 = smul.addr %s663, 4
        %s665 = scalar_lea.vmem %s2, %s664
      $region40: #{inter_block_forward.3} parent=35 // pred_fallthru
        _
    $region36: #{inter_block_forward.3} parent=5 // pred_fallthru
      _
  $region6: #{inter_block_forward.3} parent=0 // loop_footer
    %s12 = sadd.s32 1, %s8
  $region7: #{inter_block_forward.3} parent=0 // loop_footer_branch
    %7 = sbr.rel target = $region3
  $region8: #{inter_block_forward.3} parent=0 // loop_exit
    _

</llo_original>
